<compile_context>
chip_gen: v7x
topology: tpu7x:2x2x1
jax: 0.10.0
libtpu: 0.0.40
codegen_flags: <defaults>
</compile_context>

<pallas_src>
import functools

import jax
import jax.numpy as jnp
from jax.experimental import pallas as pl
from jax.experimental.pallas import tpu as pltpu

# Tap offsets (dy, dx) for weight[k], k = 0,1,2, per direction -- derived from
# DirectionalConvLayer._conv1d_direction's placement of w[0], w[1], w[2] inside
# the 3x3 kernel (conv2d is cross-correlation, padding=1).
_DIR_OFFSETS = (
    ((0, -1), (0, 0), (0, 1)),    # dir 0: horizontal
    ((-1, 0), (0, 0), (1, 0)),    # dir 1: vertical
    ((-1, -1), (0, 0), (1, 1)),   # dir 2: main diagonal
    ((1, -1), (0, 0), (-1, 1)),   # dir 3: anti-diagonal
)


def _round_up(x, m):
    return (x + m - 1) // m * m


def _dirconv_kernel(x_ref, w_ref, b_ref, o_ref, *, Pp, margin, Wp, block_b):
    """One batch block, all 4 directions. Channels in sublanes, spatial in lanes.

    x_ref: [4, block_b, Cin, L]    zero-padded flattened planes (+ lane margin)
    w_ref: [3, Cout, Cin]          shared 3-tap weight (resident across grid)
    b_ref: [Cout, 1]               bias (resident across grid)
    o_ref: [4, block_b, Cout, Pp]  outputs over all padded-plane positions
    """
    bias = b_ref[...]                                    # [Cout, 1]
    w = [w_ref[k] for k in range(3)]                     # 3 x [Cout, Cin]
    for bb in range(block_b):
        for d in range(4):
            xrow = x_ref[d, bb]                          # [Cin, L] lane-dense load
            acc = None
            for k, (dy, dx) in enumerate(_DIR_OFFSETS[d]):
                s = margin + dy * Wp + dx                # static lane offset
                tap = xrow[:, s:s + Pp]                  # [Cin, Pp] (lane shift, XLU)
                part = jnp.dot(w[k], tap, preferred_element_type=jnp.float32)
                acc = part if acc is None else acc + part
            # Lane-dense, unmasked store of a [Cout, Pp] slab.
            o_ref[d, bb] = (acc + bias).astype(o_ref.dtype)


def _pick_block_b(B):
    """Largest divisor of B <= min(8, max(1, B // 8)).

    Keeps several grid steps for small B (pipelining) while amortizing the
    fixed per-step cost for large B."""
    target = min(8, max(1, B // 8))
    for cand in range(target, 0, -1):
        if B % cand == 0:
            return cand
    return 1


def directional_conv_layer(xs, weight, bias, *, block_b=None):
    """Pallas forward of DirectionalConvLayer.

    xs:     tuple of 4 arrays [B, Cin, H, W] (NCHW), one per direction
    weight: [3, Cout, Cin]
    bias:   [Cout]
    returns tuple of 4 arrays [B, Cout, H, W]
    """
    assert len(xs) == 4, f"must be 4 directions, got {len(xs)}"
    B, Cin, H, W = xs[0].shape
    _, Cout, _ = weight.shape
    Hp, Wp = H + 2, W + 2
    P = Hp * Wp                        # flattened padded-plane size
    Pp = _round_up(P, 128)             # lane-dense output positions per direction
    margin = Wp + 1                    # max |flat tap offset|
    L = _round_up(2 * margin + Pp, 128)  # lane length incl. slack for tap shifts
    if block_b is None:
        block_b = _pick_block_b(B)
    assert B % block_b == 0, (B, block_b)
    nb = B // block_b

    # Channels-first throughout (no transposes): zero-pad spatially, flatten the
    # padded plane into the lane dim, add a margin so every static in-kernel
    # tap slice is in-bounds.
    x = jnp.stack(xs, axis=0).astype(jnp.float32)                  # [4,B,Cin,H,W]
    x = jnp.pad(x, ((0, 0), (0, 0), (0, 0), (1, 1), (1, 1)))       # [4,B,Cin,Hp,Wp]
    x = x.reshape(4, B, Cin, P)
    x = jnp.pad(x, ((0, 0), (0, 0), (0, 0), (margin, L - margin - P)))

    w = weight.astype(jnp.float32)                                 # [3,Cout,Cin]
    b2 = bias.reshape(Cout, 1).astype(jnp.float32)                 # [Cout,1]

    # TODO(synk): optional bf16 storage (f32 accumulation) for v6e/v7x would
    # halve DMA volume but changes numerics beyond the 1e-3 check; kept f32.
    out = pl.pallas_call(
        functools.partial(_dirconv_kernel, Pp=Pp, margin=margin, Wp=Wp,
                          block_b=block_b),
        out_shape=jax.ShapeDtypeStruct((4, B, Cout, Pp), jnp.float32),
        grid=(nb,),
        in_specs=[
            pl.BlockSpec((4, block_b, Cin, L), lambda i: (0, i, 0, 0)),  # activations
            pl.BlockSpec((3, Cout, Cin), lambda i: (0, 0, 0)),           # weight (resident)
            pl.BlockSpec((Cout, 1), lambda i: (0, 0)),                   # bias   (resident)
        ],
        out_specs=pl.BlockSpec((4, block_b, Cout, Pp), lambda i: (0, i, 0, 0)),
        compiler_params=pltpu.CompilerParams(
            dimension_semantics=("parallel",)),
    )(x, w, b2)

    # [4,B,Cout,Pp] -> trim lane padding -> unflatten plane -> trim border.
    out = out[..., :P].reshape(4, B, Cout, Hp, Wp)
    out = out[:, :, :, 1:H + 1, 1:W + 1]                            # [4,B,Cout,H,W]
    return tuple(out[d] for d in range(4))


def _reference(xs, weight, bias):
    """Pure-JAX reference identical to the PyTorch layer (shift-and-sum conv)."""
    outs = []
    for d in range(4):
        x = xs[d].astype(jnp.float32)
        B, Cin, H, W = x.shape
        xp = jnp.pad(x, ((0, 0), (0, 0), (1, 1), (1, 1)))
        acc = jnp.broadcast_to(bias[None, :, None, None],
                               (B, weight.shape[1], H, W)).astype(jnp.float32)
        for k, (dy, dx) in enumerate(_DIR_OFFSETS[d]):
            win = xp[:, :, 1 + dy:1 + dy + H, 1 + dx:1 + dx + W]
            acc = acc + jnp.einsum("oc,bchw->bohw", weight[k], win)
        outs.append(acc)
    return tuple(outs)


if __name__ == "__main__":
    # Small deterministic config: batch=2, Cin=4, 16x16 board, Cout=32.
    B, C_IN, H, W = 2, 4, 16, 16
    C_OUT = 32

    key = jax.random.PRNGKey(0)
    kw, kb, k0, k1, k2, k3 = jax.random.split(key, 6)
    weight = jax.random.normal(kw, (3, C_OUT, C_IN), jnp.float32) * jnp.sqrt(
        2.0 / (3 * C_IN))                                   # kaiming-style init
    bias = jax.random.normal(kb, (C_OUT,), jnp.float32) * 0.1
    xs = tuple(jax.random.normal(k, (B, C_IN, H, W), jnp.float32)
               for k in (k0, k1, k2, k3))

    fwd = jax.jit(directional_conv_layer)
    outs = fwd(xs, weight, bias)
    jax.block_until_ready(outs)

    refs = _reference(xs, weight, bias)
    for d in range(4):
        assert outs[d].shape == (B, C_OUT, H, W), outs[d].shape
        err = float(jnp.max(jnp.abs(outs[d] - refs[d])))
        assert err < 1e-3, (d, err)
        assert bool(jnp.all(jnp.isfinite(outs[d])))
    print("KERNEL_OK")
</pallas_src>

<mosaic_0001>
module attributes {stable_mosaic.version = 11 : i64} {
  func.func @_dirconv_kernel(%arg0: i32, %arg1: memref<4x1x4x512xf32, #tpu.memory_space<vmem>>, %arg2: memref<3x32x4xf32, #tpu.memory_space<vmem>>, %arg3: memref<32x1xf32, #tpu.memory_space<vmem>>, %arg4: memref<4x1x32x384xf32, #tpu.memory_space<vmem>>) attributes {dimension_semantics = [#tpu.dimension_semantics<parallel>], iteration_bounds = array<i64: 2>, scalar_prefetch = 0 : i64, scratch_operands = 0 : i64, tpu.core_type = #tpu.core_type<tc>, window_params = [{transform_indices = @transform_0, window_bounds = array<i64: 4, 1, 4, 512>}, {pipeline_mode = #tpu.pipeline_mode<synchronous>, transform_indices = @transform_1, window_bounds = array<i64: 3, 32, 4>}, {pipeline_mode = #tpu.pipeline_mode<synchronous>, transform_indices = @transform_2, window_bounds = array<i64: 32, 1>}, {transform_indices = @transform_3, window_bounds = array<i64: 4, 1, 32, 384>}]} {
    %c0 = arith.constant 0 : index
    %c0_0 = arith.constant 0 : index
    %0 = vector.load %arg3[%c0, %c0_0] : memref<32x1xf32, #tpu.memory_space<vmem>>, vector<32x1xf32>
    %c0_1 = arith.constant 0 : index
    %c0_2 = arith.constant 0 : index
    %c0_3 = arith.constant 0 : index
    %1 = vector.load %arg2[%c0_1, %c0_2, %c0_3] : memref<3x32x4xf32, #tpu.memory_space<vmem>>, vector<1x32x4xf32>
    %2 = vector.shape_cast %1 : vector<1x32x4xf32> to vector<32x4xf32>
    %c1 = arith.constant 1 : index
    %c0_4 = arith.constant 0 : index
    %c0_5 = arith.constant 0 : index
    %3 = vector.load %arg2[%c1, %c0_4, %c0_5] : memref<3x32x4xf32, #tpu.memory_space<vmem>>, vector<1x32x4xf32>
    %4 = vector.shape_cast %3 : vector<1x32x4xf32> to vector<32x4xf32>
    %c2 = arith.constant 2 : index
    %c0_6 = arith.constant 0 : index
    %c0_7 = arith.constant 0 : index
    %5 = vector.load %arg2[%c2, %c0_6, %c0_7] : memref<3x32x4xf32, #tpu.memory_space<vmem>>, vector<1x32x4xf32>
    %6 = vector.shape_cast %5 : vector<1x32x4xf32> to vector<32x4xf32>
    %c0_8 = arith.constant 0 : index
    %c0_9 = arith.constant 0 : index
    %c0_10 = arith.constant 0 : index
    %c0_11 = arith.constant 0 : index
    %7 = vector.load %arg1[%c0_8, %c0_9, %c0_10, %c0_11] : memref<4x1x4x512xf32, #tpu.memory_space<vmem>>, vector<1x1x4x512xf32>
    %8 = vector.shape_cast %7 : vector<1x1x4x512xf32> to vector<4x512xf32>
    %9 = vector.extract_strided_slice %8 {offsets = [0, 18], sizes = [4, 384], strides = [1, 1]} : vector<4x512xf32> to vector<4x384xf32>
    %cst = arith.constant dense<0.000000e+00> : vector<32x384xf32>
    %10 = tpu.matmul %2, %9, %cst {dimension_numbers = #tpu.dot_dimension_numbers<[1], [0], [0], [1], [0, 0, 1, 1], [], []>} : vector<32x4xf32>, vector<4x384xf32>, vector<32x384xf32> -> vector<32x384xf32>
    %11 = vector.extract_strided_slice %8 {offsets = [0, 19], sizes = [4, 384], strides = [1, 1]} : vector<4x512xf32> to vector<4x384xf32>
    %cst_12 = arith.constant dense<0.000000e+00> : vector<32x384xf32>
    %12 = tpu.matmul %4, %11, %cst_12 {dimension_numbers = #tpu.dot_dimension_numbers<[1], [0], [0], [1], [0, 0, 1, 1], [], []>} : vector<32x4xf32>, vector<4x384xf32>, vector<32x384xf32> -> vector<32x384xf32>
    %13 = arith.addf %10, %12 : vector<32x384xf32>
    %14 = vector.extract_strided_slice %8 {offsets = [0, 20], sizes = [4, 384], strides = [1, 1]} : vector<4x512xf32> to vector<4x384xf32>
    %cst_13 = arith.constant dense<0.000000e+00> : vector<32x384xf32>
    %15 = tpu.matmul %6, %14, %cst_13 {dimension_numbers = #tpu.dot_dimension_numbers<[1], [0], [0], [1], [0, 0, 1, 1], [], []>} : vector<32x4xf32>, vector<4x384xf32>, vector<32x384xf32> -> vector<32x384xf32>
    %16 = arith.addf %13, %15 : vector<32x384xf32>
    %17 = vector.broadcast %0 : vector<32x1xf32> to vector<32x384xf32>
    %18 = arith.addf %16, %17 : vector<32x384xf32>
    %c0_14 = arith.constant 0 : index
    %c0_15 = arith.constant 0 : index
    %c0_16 = arith.constant 0 : index
    %c0_17 = arith.constant 0 : index
    %19 = vector.load %arg4[%c0_14, %c0_15, %c0_16, %c0_17] : memref<4x1x32x384xf32, #tpu.memory_space<vmem>>, vector<1x1x32x384xf32>
    %20 = vector.shape_cast %19 : vector<1x1x32x384xf32> to vector<32x384xf32>
    %21 = vector.shape_cast %18 : vector<32x384xf32> to vector<1x1x32x384xf32>
    tpu.vector_store %arg4[%c0_14, %c0_15, %c0_16, %c0_17], %21 {strides = array<i32>} : memref<4x1x32x384xf32, #tpu.memory_space<vmem>>, vector<1x1x32x384xf32>,
    %c1_18 = arith.constant 1 : index
    %c0_19 = arith.constant 0 : index
    %c0_20 = arith.constant 0 : index
    %c0_21 = arith.constant 0 : index
    %22 = vector.load %arg1[%c1_18, %c0_19, %c0_20, %c0_21] : memref<4x1x4x512xf32, #tpu.memory_space<vmem>>, vector<1x1x4x512xf32>
    %23 = vector.shape_cast %22 : vector<1x1x4x512xf32> to vector<4x512xf32>
    %24 = vector.extract_strided_slice %23 {offsets = [0, 1], sizes = [4, 384], strides = [1, 1]} : vector<4x512xf32> to vector<4x384xf32>
    %cst_22 = arith.constant dense<0.000000e+00> : vector<32x384xf32>
    %25 = tpu.matmul %2, %24, %cst_22 {dimension_numbers = #tpu.dot_dimension_numbers<[1], [0], [0], [1], [0, 0, 1, 1], [], []>} : vector<32x4xf32>, vector<4x384xf32>, vector<32x384xf32> -> vector<32x384xf32>
    %26 = vector.extract_strided_slice %23 {offsets = [0, 19], sizes = [4, 384], strides = [1, 1]} : vector<4x512xf32> to vector<4x384xf32>
    %cst_23 = arith.constant dense<0.000000e+00> : vector<32x384xf32>
    %27 = tpu.matmul %4, %26, %cst_23 {dimension_numbers = #tpu.dot_dimension_numbers<[1], [0], [0], [1], [0, 0, 1, 1], [], []>} : vector<32x4xf32>, vector<4x384xf32>, vector<32x384xf32> -> vector<32x384xf32>
    %28 = arith.addf %25, %27 : vector<32x384xf32>
    %29 = vector.extract_strided_slice %23 {offsets = [0, 37], sizes = [4, 384], strides = [1, 1]} : vector<4x512xf32> to vector<4x384xf32>
    %cst_24 = arith.constant dense<0.000000e+00> : vector<32x384xf32>
    %30 = tpu.matmul %6, %29, %cst_24 {dimension_numbers = #tpu.dot_dimension_numbers<[1], [0], [0], [1], [0, 0, 1, 1], [], []>} : vector<32x4xf32>, vector<4x384xf32>, vector<32x384xf32> -> vector<32x384xf32>
    %31 = arith.addf %28, %30 : vector<32x384xf32>
    %32 = vector.broadcast %0 : vector<32x1xf32> to vector<32x384xf32>
    %33 = arith.addf %31, %32 : vector<32x384xf32>
    %c1_25 = arith.constant 1 : index
    %c0_26 = arith.constant 0 : index
    %c0_27 = arith.constant 0 : index
    %c0_28 = arith.constant 0 : index
    %34 = vector.load %arg4[%c1_25, %c0_26, %c0_27, %c0_28] : memref<4x1x32x384xf32, #tpu.memory_space<vmem>>, vector<1x1x32x384xf32>
    %35 = vector.shape_cast %34 : vector<1x1x32x384xf32> to vector<32x384xf32>
    %36 = vector.shape_cast %33 : vector<32x384xf32> to vector<1x1x32x384xf32>
    tpu.vector_store %arg4[%c1_25, %c0_26, %c0_27, %c0_28], %36 {strides = array<i32>} : memref<4x1x32x384xf32, #tpu.memory_space<vmem>>, vector<1x1x32x384xf32>,
    %c2_29 = arith.constant 2 : index
    %c0_30 = arith.constant 0 : index
    %c0_31 = arith.constant 0 : index
    %c0_32 = arith.constant 0 : index
    %37 = vector.load %arg1[%c2_29, %c0_30, %c0_31, %c0_32] : memref<4x1x4x512xf32, #tpu.memory_space<vmem>>, vector<1x1x4x512xf32>
    %38 = vector.shape_cast %37 : vector<1x1x4x512xf32> to vector<4x512xf32>
    %39 = vector.extract_strided_slice %38 {offsets = [0, 0], sizes = [4, 384], strides = [1, 1]} : vector<4x512xf32> to vector<4x384xf32>
    %cst_33 = arith.constant dense<0.000000e+00> : vector<32x384xf32>
    %40 = tpu.matmul %2, %39, %cst_33 {dimension_numbers = #tpu.dot_dimension_numbers<[1], [0], [0], [1], [0, 0, 1, 1], [], []>} : vector<32x4xf32>, vector<4x384xf32>, vector<32x384xf32> -> vector<32x384xf32>
    %41 = vector.extract_strided_slice %38 {offsets = [0, 19], sizes = [4, 384], strides = [1, 1]} : vector<4x512xf32> to vector<4x384xf32>
    %cst_34 = arith.constant dense<0.000000e+00> : vector<32x384xf32>
    %42 = tpu.matmul %4, %41, %cst_34 {dimension_numbers = #tpu.dot_dimension_numbers<[1], [0], [0], [1], [0, 0, 1, 1], [], []>} : vector<32x4xf32>, vector<4x384xf32>, vector<32x384xf32> -> vector<32x384xf32>
    %43 = arith.addf %40, %42 : vector<32x384xf32>
    %44 = vector.extract_strided_slice %38 {offsets = [0, 38], sizes = [4, 384], strides = [1, 1]} : vector<4x512xf32> to vector<4x384xf32>
    %cst_35 = arith.constant dense<0.000000e+00> : vector<32x384xf32>
    %45 = tpu.matmul %6, %44, %cst_35 {dimension_numbers = #tpu.dot_dimension_numbers<[1], [0], [0], [1], [0, 0, 1, 1], [], []>} : vector<32x4xf32>, vector<4x384xf32>, vector<32x384xf32> -> vector<32x384xf32>
    %46 = arith.addf %43, %45 : vector<32x384xf32>
    %47 = vector.broadcast %0 : vector<32x1xf32> to vector<32x384xf32>
    %48 = arith.addf %46, %47 : vector<32x384xf32>
    %c2_36 = arith.constant 2 : index
    %c0_37 = arith.constant 0 : index
    %c0_38 = arith.constant 0 : index
    %c0_39 = arith.constant 0 : index
    %49 = vector.load %arg4[%c2_36, %c0_37, %c0_38, %c0_39] : memref<4x1x32x384xf32, #tpu.memory_space<vmem>>, vector<1x1x32x384xf32>
    %50 = vector.shape_cast %49 : vector<1x1x32x384xf32> to vector<32x384xf32>
    %51 = vector.shape_cast %48 : vector<32x384xf32> to vector<1x1x32x384xf32>
    tpu.vector_store %arg4[%c2_36, %c0_37, %c0_38, %c0_39], %51 {strides = array<i32>} : memref<4x1x32x384xf32, #tpu.memory_space<vmem>>, vector<1x1x32x384xf32>,
    %c3 = arith.constant 3 : index
    %c0_40 = arith.constant 0 : index
    %c0_41 = arith.constant 0 : index
    %c0_42 = arith.constant 0 : index
    %52 = vector.load %arg1[%c3, %c0_40, %c0_41, %c0_42] : memref<4x1x4x512xf32, #tpu.memory_space<vmem>>, vector<1x1x4x512xf32>
    %53 = vector.shape_cast %52 : vector<1x1x4x512xf32> to vector<4x512xf32>
    %54 = vector.extract_strided_slice %53 {offsets = [0, 36], sizes = [4, 384], strides = [1, 1]} : vector<4x512xf32> to vector<4x384xf32>
    %cst_43 = arith.constant dense<0.000000e+00> : vector<32x384xf32>
    %55 = tpu.matmul %2, %54, %cst_43 {dimension_numbers = #tpu.dot_dimension_numbers<[1], [0], [0], [1], [0, 0, 1, 1], [], []>} : vector<32x4xf32>, vector<4x384xf32>, vector<32x384xf32> -> vector<32x384xf32>
    %56 = vector.extract_strided_slice %53 {offsets = [0, 19], sizes = [4, 384], strides = [1, 1]} : vector<4x512xf32> to vector<4x384xf32>
    %cst_44 = arith.constant dense<0.000000e+00> : vector<32x384xf32>
    %57 = tpu.matmul %4, %56, %cst_44 {dimension_numbers = #tpu.dot_dimension_numbers<[1], [0], [0], [1], [0, 0, 1, 1], [], []>} : vector<32x4xf32>, vector<4x384xf32>, vector<32x384xf32> -> vector<32x384xf32>
    %58 = arith.addf %55, %57 : vector<32x384xf32>
    %59 = vector.extract_strided_slice %53 {offsets = [0, 2], sizes = [4, 384], strides = [1, 1]} : vector<4x512xf32> to vector<4x384xf32>
    %cst_45 = arith.constant dense<0.000000e+00> : vector<32x384xf32>
    %60 = tpu.matmul %6, %59, %cst_45 {dimension_numbers = #tpu.dot_dimension_numbers<[1], [0], [0], [1], [0, 0, 1, 1], [], []>} : vector<32x4xf32>, vector<4x384xf32>, vector<32x384xf32> -> vector<32x384xf32>
    %61 = arith.addf %58, %60 : vector<32x384xf32>
    %62 = vector.broadcast %0 : vector<32x1xf32> to vector<32x384xf32>
    %63 = arith.addf %61, %62 : vector<32x384xf32>
    %c3_46 = arith.constant 3 : index
    %c0_47 = arith.constant 0 : index
    %c0_48 = arith.constant 0 : index
    %c0_49 = arith.constant 0 : index
    %64 = vector.load %arg4[%c3_46, %c0_47, %c0_48, %c0_49] : memref<4x1x32x384xf32, #tpu.memory_space<vmem>>, vector<1x1x32x384xf32>
    %65 = vector.shape_cast %64 : vector<1x1x32x384xf32> to vector<32x384xf32>
    %66 = vector.shape_cast %63 : vector<32x384xf32> to vector<1x1x32x384xf32>
    tpu.vector_store %arg4[%c3_46, %c0_47, %c0_48, %c0_49], %66 {strides = array<i32>} : memref<4x1x32x384xf32, #tpu.memory_space<vmem>>, vector<1x1x32x384xf32>,
    return
  }
  func.func @transform_0(%arg0: i32) -> (i32, i32, i32, i32) {
    %c0_i32 = arith.constant 0 : i32
    %c0_i32_0 = arith.constant 0 : i32
    %c0_i32_1 = arith.constant 0 : i32
    %c0_i32_2 = arith.constant 0 : i32
    return %c0_i32, %arg0, %c0_i32_0, %c0_i32_1 : i32, i32, i32, i32
  }
  func.func @transform_1(%arg0: i32) -> (i32, i32, i32) {
    %c0_i32 = arith.constant 0 : i32
    %c0_i32_0 = arith.constant 0 : i32
    %c0_i32_1 = arith.constant 0 : i32
    %c0_i32_2 = arith.constant 0 : i32
    return %c0_i32, %c0_i32_0, %c0_i32_1 : i32, i32, i32
  }
  func.func @transform_2(%arg0: i32) -> (i32, i32) {
    %c0_i32 = arith.constant 0 : i32
    %c0_i32_0 = arith.constant 0 : i32
    %c0_i32_1 = arith.constant 0 : i32
    return %c0_i32, %c0_i32_0 : i32, i32
  }
  func.func @transform_3(%arg0: i32) -> (i32, i32, i32, i32) {
    %c0_i32 = arith.constant 0 : i32
    %c0_i32_0 = arith.constant 0 : i32
    %c0_i32_1 = arith.constant 0 : i32
    %c0_i32_2 = arith.constant 0 : i32
    return %c0_i32, %arg0, %c0_i32_0, %c0_i32_1 : i32, i32, i32, i32
  }
}

</mosaic_0001>

<llo_original>
// kernel: directional_conv_layer.1
$region0: #{directional_conv_layer.1}
  #allocation0 [shape = 'u32[]', space=smem, size = 0x4, offset = 0x4, fixed_abs, tag = 'smem constant byte address 0x4 - core index']
  #allocation1 [shape = 'u32[144,128]{1,0:T(1,128)}', space=vmem, size = 0x12000, scoped, tag = 'internal scratch']
  %s0 = inlined_call_operand.vmem [shape: f32[4,2,4,512], index: 0, kind: input, shape index: {}]
  %s1 = inlined_call_operand.vmem [shape: f32[3,32,4], index: 1, kind: input, shape index: {}]
  %s2 = inlined_call_operand.vmem [shape: f32[32,1], index: 2, kind: input, shape index: {}]
  %s3 = inlined_call_operand.vmem [shape: f32[4,2,32,384], index: 3, kind: output, shape index: {}]
  %s4 = sld [smem:[#allocation0]]
  $region87: #{directional_conv_layer.1} parent=0
    _
  %s6 = ssub.s32 1, %s4
  %s7 = scalar_select 0, %s6, %s4
  $region1: #{directional_conv_layer.1} parent=0
    #allocation2 [shape = 'u8[65536]{0}', space=vmem, size = 0x10000, scoped, tag = 'input window, operand 0']
    #allocation3 [shape = 'u8[393216]{0}', space=vmem, size = 0x60000, scoped, tag = 'output window, operand 0']
    loop: start=0, step=1, limit=4
    $region2: #{directional_conv_layer.1} parent=1 // loop_pre_header
      _
    $region3: #{directional_conv_layer.1} parent=1 // loop_header
      %s9 = sphi 0, %s13
      %p10 = scmp.ge.s32.totalorder %s9, 4
      %s19 = sphi 0, %s21
      %s22 = sphi 0, %s19
      %s23 = sphi 0, %s22
      %s39 = sphi 0, %s23
      %s43 = sphi 0, %s43
      %s45 = sphi 0, %s43
      %s46 = sphi 0, %s45
      %s60 = sphi 0, %s46
      %s64 = sphi 0, %s64
      %s66 = sphi 0, %s64
      %s67 = sphi 0, %s66
      %s81 = sphi 0, %s67
      %s87 = sphi 0, %s89
      %s90 = sphi 0, %s87
      %s91 = sphi 0, %s90
      %s107 = sphi 0, %s91
    $region4: #{directional_conv_layer.1} parent=1 // loop_header_branch
      %12 = sbr.rel (%p10) target = $region8
    $region5: #{directional_conv_layer.1} parent=1 // loop_body
      %s14 = ssub.s32 %s9, 1
      %s15 = ssub.s32 %s9, 2
      %s16 = sadd.s32 %s9, 1
      %s17 = ssub.s32 %s9, %s16
      %p18 = scmp.eq.s32.totalorder %s17, 0
      %s20 = sadd.s32 %s19, 1
      %s21 = scalar_select %p18, %s19, %s20
      %p24 = pneg %p18
      %p25 = scmp.eq.s32.totalorder %s9, 1
      %p26 = por %p24, %p25
      %p27 = scmp.ne.s32.totalorder %s19, %s22
      %p28 = scmp.eq.s32.totalorder %s9, 0
      %p29 = por %p27, %p28
      %p30 = scmp.ne.s32.totalorder %s19, %s22
      %p31 = scmp.eq.s32.totalorder %s14, 1
      %p32 = por %p30, %p31
      %p33 = scmp.ne.s32.totalorder %s22, %s23
      %p34 = scmp.eq.s32.totalorder %s14, 0
      %p35 = por %p33, %p34
      %p36 = scmp.ne.s32.totalorder %s22, %s23
      %p37 = scmp.eq.s32.totalorder %s15, 1
      %p38 = por %p36, %p37
      %p40 = scmp.ne.s32.totalorder %s23, %s39
      %p41 = scmp.eq.s32.totalorder %s15, 0
      %p42 = por %p40, %p41
      %s44 = sadd.s32 %s43, 1
      %p47 = scmp.eq.s32.totalorder %s9, 1
      %p48 = scmp.ne.s32.totalorder %s43, %s45
      %p49 = scmp.eq.s32.totalorder %s9, 0
      %p50 = por %p48, %p49
      %p51 = scmp.ne.s32.totalorder %s43, %s45
      %p52 = scmp.eq.s32.totalorder %s14, 1
      %p53 = por %p51, %p52
      %p54 = scmp.ne.s32.totalorder %s45, %s46
      %p55 = scmp.eq.s32.totalorder %s14, 0
      %p56 = por %p54, %p55
      %p57 = scmp.ne.s32.totalorder %s45, %s46
      %p58 = scmp.eq.s32.totalorder %s15, 1
      %p59 = por %p57, %p58
      %p61 = scmp.ne.s32.totalorder %s46, %s60
      %p62 = scmp.eq.s32.totalorder %s15, 0
      %p63 = por %p61, %p62
      %s65 = sadd.s32 %s64, 1
      %p68 = scmp.eq.s32.totalorder %s9, 1
      %p69 = scmp.ne.s32.totalorder %s64, %s66
      %p70 = scmp.eq.s32.totalorder %s9, 0
      %p71 = por %p69, %p70
      %p72 = scmp.ne.s32.totalorder %s64, %s66
      %p73 = scmp.eq.s32.totalorder %s14, 1
      %p74 = por %p72, %p73
      %p75 = scmp.ne.s32.totalorder %s66, %s67
      %p76 = scmp.eq.s32.totalorder %s14, 0
      %p77 = por %p75, %p76
      %p78 = scmp.ne.s32.totalorder %s66, %s67
      %p79 = scmp.eq.s32.totalorder %s15, 1
      %p80 = por %p78, %p79
      %p82 = scmp.ne.s32.totalorder %s67, %s81
      %p83 = scmp.eq.s32.totalorder %s15, 0
      %p84 = por %p82, %p83
      %s85 = ssub.s32 %s9, %s16
      %p86 = scmp.eq.s32.totalorder %s85, 0
      %s88 = sadd.s32 %s87, 1
      %s89 = scalar_select %p86, %s87, %s88
      %p92 = pneg %p86
      %p93 = scmp.eq.s32.totalorder %s9, 1
      %p94 = por %p92, %p93
      %p95 = scmp.ne.s32.totalorder %s87, %s90
      %p96 = scmp.eq.s32.totalorder %s9, 0
      %p97 = por %p95, %p96
      %p98 = scmp.ne.s32.totalorder %s87, %s90
      %p99 = scmp.eq.s32.totalorder %s14, 1
      %p100 = por %p98, %p99
      %p101 = scmp.ne.s32.totalorder %s90, %s91
      %p102 = scmp.eq.s32.totalorder %s14, 0
      %p103 = por %p101, %p102
      %p104 = scmp.ne.s32.totalorder %s90, %s91
      %p105 = scmp.eq.s32.totalorder %s15, 1
      %p106 = por %p104, %p105
      %p108 = scmp.ne.s32.totalorder %s91, %s107
      %p109 = scmp.eq.s32.totalorder %s15, 0
      %p110 = por %p108, %p109
      %p111 = scmp.le.s32.totalorder 1, %s9
      %p112 = scmp.lt.s32.totalorder %s9, 3
      %p113 = pnand %p111, %p112
      %p114 = pneg %p113
      // Predicated region
      $region9: #{directional_conv_layer.1} parent=5 // pred_check
        _
      $region10: #{directional_conv_layer.1} parent=5 // pred_check_branch
        %116 = sbr.rel (%p113) target = $region12
      $region11: #{directional_conv_layer.1} parent=5 // pred_region
        %s117 = ssub.s32 %s9, 1
        // Predicated region
        $region13: #{directional_conv_layer.1} parent=11 // pred_check
          %p118 = pneg %p56
        $region14: #{directional_conv_layer.1} parent=11 // pred_check_branch
          %120 = sbr.rel (%p118) target = $region16
        $region15: #{directional_conv_layer.1} parent=11 // pred_region
          _
        $region16: #{directional_conv_layer.1} parent=11 // pred_fallthru
          _
        // Predicated region
        $region17: #{directional_conv_layer.1} parent=11 // pred_check
          %p121 = pneg %p77
        $region18: #{directional_conv_layer.1} parent=11 // pred_check_branch
          %123 = sbr.rel (%p121) target = $region20
        $region19: #{directional_conv_layer.1} parent=11 // pred_region
          _
        $region20: #{directional_conv_layer.1} parent=11 // pred_fallthru
          _
      $region12: #{directional_conv_layer.1} parent=5 // pred_fallthru
        _
      %p124 = scmp.lt.s32.totalorder %s9, 2
      // Predicated region
      $region21: #{directional_conv_layer.1} parent=5 // pred_check
        %p125 = pneg %p124
      $region22: #{directional_conv_layer.1} parent=5 // pred_check_branch
        %127 = sbr.rel (%p125) target = $region24
      $region23: #{directional_conv_layer.1} parent=5 // pred_region
        // Predicated region
        $region25: #{directional_conv_layer.1} parent=23 // pred_check
          %p128 = pneg %p29
        $region26: #{directional_conv_layer.1} parent=23 // pred_check_branch
          %130 = sbr.rel (%p128) target = $region28
        $region27: #{directional_conv_layer.1} parent=23 // pred_region
          %s131 = sand.u32 %s19, 1
          %s132 = sand.u32 %s19, 1
          %s133 = smul.addr %s132, 64
          %s134 = scalar_lea.vmem [#allocation2], %s133
          %s135 = smul.addr %s9, 4
          %s136 = smul.addr %s135, 4
          %s137 = scalar_lea.vmem %s0, %s136
          // Predicated region
          $region29: #{directional_conv_layer.1} parent=27 // pred_check
            _
          $region30: #{directional_conv_layer.1} parent=27 // pred_check_branch
            %139 = sbr.rel (0) target = $region32
          $region31: #{directional_conv_layer.1} parent=27 // pred_region
            // Predicated region
            $region33: #{directional_conv_layer.1} parent=31 // pred_check
              _
            $region34: #{directional_conv_layer.1} parent=31 // pred_check_branch
              %141 = sbr.rel (0) target = $region36
            $region35: #{directional_conv_layer.1} parent=31 // pred_region
              loop: start=0, step=1, limit=1
              $region37: #{directional_conv_layer.1} parent=35 // loop_pre_header
                _
              $region38: #{directional_conv_layer.1} parent=35 // loop_header
                %s143 = sphi 0, %s147
                %p144 = scmp.ge.s32.totalorder %s143, 1
                %s148 = sphi %s137, %s137
                %s149 = sphi %s134, %s134
              $region39: #{directional_conv_layer.1} parent=35 // loop_header_branch
                %146 = sbr.rel (%p144) target = $region43
              $region40: #{directional_conv_layer.1} parent=35 // loop_body
                %v150 = vld [vmem:[%s148] sm:$0xff]
                %151 = vst [vmem:[%s149] sm:$0xff] %v150
                %v152 = vld [vmem:[%s148 + $0x8] sm:$0xff]
                %153 = vst [vmem:[%s149 + $0x8] sm:$0xff] %v152
                %v154 = vld [vmem:[%s148 + $0x20] sm:$0xff]
                %155 = vst [vmem:[%s149 + $0x10] sm:$0xff] %v154
                %v156 = vld [vmem:[%s148 + $0x28] sm:$0xff]
                %157 = vst [vmem:[%s149 + $0x18] sm:$0xff] %v156
                %v158 = vld [vmem:[%s148 + $0x40] sm:$0xff]
                %159 = vst [vmem:[%s149 + $0x20] sm:$0xff] %v158
                %v160 = vld [vmem:[%s148 + $0x48] sm:$0xff]
                %161 = vst [vmem:[%s149 + $0x28] sm:$0xff] %v160
                %v162 = vld [vmem:[%s148 + $0x60] sm:$0xff]
                %163 = vst [vmem:[%s149 + $0x30] sm:$0xff] %v162
                %v164 = vld [vmem:[%s148 + $0x68] sm:$0xff]
                %165 = vst [vmem:[%s149 + $0x38] sm:$0xff] %v164
              $region41: #{directional_conv_layer.1} parent=35 // loop_footer
                %s147 = sadd.s32 1, %s143
              $region42: #{directional_conv_layer.1} parent=35 // loop_footer_branch
                %142 = sbr.rel target = $region38
              $region43: #{directional_conv_layer.1} parent=35 // loop_exit
                _
            $region36: #{directional_conv_layer.1} parent=31 // pred_fallthru
              _
            // Predicated region
            $region44: #{directional_conv_layer.1} parent=31 // pred_check
              _
            $region45: #{directional_conv_layer.1} parent=31 // pred_check_branch
              %167 = sbr.rel target = $region47
            $region46: #{directional_conv_layer.1} parent=31 // pred_region
              _
            $region47: #{directional_conv_layer.1} parent=31 // pred_fallthru
              _
          $region32: #{directional_conv_layer.1} parent=27 // pred_fallthru
            _
          %168 = vnop
        $region28: #{directional_conv_layer.1} parent=23 // pred_fallthru
          _
      $region24: #{directional_conv_layer.1} parent=5 // pred_fallthru
        _
      %p169 = scmp.le.s32.totalorder 1, %s9
      %p170 = scmp.lt.s32.totalorder %s9, 3
      %p171 = pnand %p169, %p170
      %p172 = pneg %p171
      // Predicated region
      $region48: #{directional_conv_layer.1} parent=5 // pred_check
        _
      $region49: #{directional_conv_layer.1} parent=5 // pred_check_branch
        %174 = sbr.rel (%p171) target = $region51
      $region50: #{directional_conv_layer.1} parent=5 // pred_region
        %s175 = ssub.s32 %s9, 1
        %s176 = sand.u32 %s22, 1
        %s177 = sand.u32 %s22, 1
        %s178 = smul.addr %s177, 64
        %s179 = scalar_lea.vmem [#allocation2], %s178
        // Predicated region
        $region52: #{directional_conv_layer.1} parent=50 // pred_check
          %p180 = pneg %p35
        $region53: #{directional_conv_layer.1} parent=50 // pred_check_branch
          %182 = sbr.rel (%p180) target = $region55
        $region54: #{directional_conv_layer.1} parent=50 // pred_region
          _
        $region55: #{directional_conv_layer.1} parent=50 // pred_fallthru
          _
        %s183 = sand.u32 %s22, 1
        %s184 = sand.u32 %s22, 1
        %s185 = smul.addr %s184, 64
        %s186 = scalar_lea.vmem [#allocation2], %s185
        %p187 = pneg %p35
        %p188 = pneg %p32
        %p189 = pneg %p56
        %p190 = pneg %p53
        %p191 = pneg %p77
        %p192 = pneg %p74
        %p193 = pneg %p103
        %p194 = pneg %p100
        %s195 = sand.u32 %s90, 1
        %s196 = sand.u32 %s90, 1
        %s197 = smul.addr %s196, 384
        %s198 = scalar_lea.vmem [#allocation3], %s197
        %v199 = vld [vmem:[%s2] sm:$0xff]
        %v200 = vld [vmem:[%s2 + $0x8] sm:$0xff]
        %v201 = vld [vmem:[%s2 + $0x10] sm:$0xff]
        %v202 = vld [vmem:[%s2 + $0x18] sm:$0xff]
        %v203 = vld [vmem:[%s1] sm:$0xff]
        %v204 = vld [vmem:[%s1 + $0x8] sm:$0xff]
        %v205 = vld [vmem:[%s1 + $0x10] sm:$0xff]
        %v206 = vld [vmem:[%s1 + $0x18] sm:$0xff]
        %s207 = scalar_lea.vmem %s1, 32
        %v208 = vld [vmem:[%s207] sm:$0xff]
        %v209 = vld [vmem:[%s207 + $0x8] sm:$0xff]
        %v210 = vld [vmem:[%s207 + $0x10] sm:$0xff]
        %v211 = vld [vmem:[%s207 + $0x18] sm:$0xff]
        %s212 = scalar_lea.vmem %s1, 64
        %v213 = vld [vmem:[%s212] sm:$0xff]
        %v214 = vld [vmem:[%s212 + $0x8] sm:$0xff]
        %v215 = vld [vmem:[%s212 + $0x10] sm:$0xff]
        %v216 = vld [vmem:[%s212 + $0x18] sm:$0xff]
        %v217 = vld [vmem:[%s179] sm:$0xff]
        %v218 = vld [vmem:[%s179 + $0x8] sm:$0xff]
        %v221 = vcombine.high %v217, %v217
        %v222 = vcombine.high %v218, %v218
        %223 = vrot.lane.b32.xlu0 %v217, 109
        %v224 = vpop.permute.xlu0 %223
        %225 = vrot.lane.b32.xlu0 %v221, 109
        %v226 = vpop.permute.xlu0 %225
        %227 = vrot.lane.b32.xlu0 %v218, 109
        %v228 = vpop.permute.xlu0 %227
        %229 = vrot.lane.b32.xlu0 %v222, 109
        %v230 = vpop.permute.xlu0 %229
        %vm231 = vcmask 891904
        %v232 = vsel %vm231, %v224, %v226
        %v233 = vsel %vm231, %v226, %v228
        %v234 = vsel %vm231, %v228, %v230
        %vm235 = vcmask 31744
        %v237 = vsel %vm235, %v208, 0
        %v240 = vsel %vm235, %v209, 0
        %v243 = vsel %vm235, %v210, 0
        %v246 = vsel %vm235, %v211, 0
        %vm248 = vcmask 1043456
        %v249 = vsel %vm248, %v232, 0
        %v251 = vsel %vm248, %v233, 0
        %v253 = vsel %vm248, %v234, 0
        %255 = vmatprep.subr.mxu0 %v251
        %256 = vmatpush1.msra.mxu0 %v249
        %257 = vmatprep.subr.mxu0 0.0
        %258 = vmatpush1.msra.mxu0 0.0
        %259 = vmatprep.subr.mxu0 0.0
        %260 = vmatpush1.msra.mxu0 0.0
        %261 = vmatprep.subr.mxu0 0.0
        %262 = vmatpush1.msra.mxu0 0.0
        %263 = vmatprep.subr.mxu0 0.0
        %264 = vmatpush1.msra.mxu0 0.0
        %265 = vmatprep.subr.mxu0 0.0
        %266 = vmatpush1.msra.mxu0 0.0
        %267 = vmatprep.subr.mxu0 0.0
        %268 = vmatpush1.msra.mxu0 0.0
        %269 = vmatprep.subr.mxu0 0.0
        %270 = vmatpush1.msra.mxu0 0.0
        %271 = vmatprep.subr.mxu0 0.0
        %272 = vmatpush1.msra.mxu0 0.0
        %273 = vmatprep.subr.mxu0 0.0
        %274 = vmatpush1.msra.mxu0 0.0
        %275 = vmatprep.subr.mxu0 0.0
        %276 = vmatpush1.msra.mxu0 0.0
        %277 = vmatprep.subr.mxu0 0.0
        %278 = vmatpush1.msra.mxu0 0.0
        %279 = vmatprep.subr.mxu0 0.0
        %280 = vmatpush1.msra.mxu0 0.0
        %281 = vmatprep.subr.mxu0 0.0
        %282 = vmatpush1.msra.mxu0 0.0
        %283 = vmatprep.subr.mxu0 0.0
        %284 = vmatpush1.msra.mxu0 0.0
        %285 = vmatprep.subr.mxu0 0.0
        %286 = vmatpush1.msra.mxu0 0.0
        %287 = vmatprep.subr.mxu0 0.0
        %288 = vmatpush1.msra.mxu0 0.0
        %289 = vmatprep.subr.mxu0 0.0
        %290 = vmatpush1.msra.mxu0 0.0
        %291 = vmatprep.subr.mxu0 0.0
        %292 = vmatpush1.msra.mxu0 0.0
        %293 = vmatprep.subr.mxu0 0.0
        %294 = vmatpush1.msra.mxu0 0.0
        %295 = vmatprep.subr.mxu0 0.0
        %296 = vmatpush1.msra.mxu0 0.0
        %297 = vmatprep.subr.mxu0 0.0
        %298 = vmatpush1.msra.mxu0 0.0
        %299 = vmatprep.subr.mxu0 0.0
        %300 = vmatpush1.msra.mxu0 0.0
        %301 = vmatprep.subr.mxu0 0.0
        %302 = vmatpush1.msra.mxu0 0.0
        %303 = vmatprep.subr.mxu0 0.0
        %304 = vmatpush1.msra.mxu0 0.0
        %305 = vmatprep.subr.mxu0 0.0
        %306 = vmatpush1.msra.mxu0 0.0
        %307 = vmatprep.subr.mxu0 0.0
        %308 = vmatpush1.msra.mxu0 0.0
        %309 = vmatprep.subr.mxu0 0.0
        %310 = vmatpush1.msra.mxu0 0.0
        %311 = vmatprep.subr.mxu0 0.0
        %312 = vmatpush1.msra.mxu0 0.0
        %313 = vmatprep.subr.mxu0 0.0
        %314 = vmatpush1.msra.mxu0 0.0
        %315 = vmatprep.subr.mxu0 0.0
        %316 = vmatpush1.msra.mxu0 0.0
        %317 = vmatprep.subr.mxu0 0.0
        %318 = vmatpush1.msra.mxu0 0.0
        %319 = vmatprep.mubr.f32.mxu0 0.0
        %320 = vmatmul.mubr.f32.gmra.mrb[0].mxu0 %v237
        %v321 = vpop.f32.mrb[0].mxu0
        %v322 = vadd.f32 0.0, %v321
        %v323 = vpop.f32.mrb[0].mxu0
        %v324 = vadd.f32 0.0, %v323
        %325 = vmatprep.mubr.f32.mxu0 0.0
        %326 = vmatmul.mubr.f32.gmra.mrb[0].mxu0 %v240
        %v327 = vpop.f32.mrb[0].mxu0
        %v328 = vadd.f32 0.0, %v327
        %v329 = vpop.f32.mrb[0].mxu0
        %v330 = vadd.f32 0.0, %v329
        %331 = vmatprep.mubr.f32.mxu0 0.0
        %332 = vmatmul.mubr.f32.gmra.mrb[0].mxu0 %v243
        %v333 = vpop.f32.mrb[0].mxu0
        %v334 = vadd.f32 0.0, %v333
        %v335 = vpop.f32.mrb[0].mxu0
        %v336 = vadd.f32 0.0, %v335
        %337 = vmatprep.mubr.f32.mxu0 0.0
        %338 = vmatmul.mubr.f32.gmra.mrb[0].mxu0 %v246
        %v339 = vpop.f32.mrb[0].mxu0
        %v340 = vadd.f32 0.0, %v339
        %v341 = vpop.f32.mrb[0].mxu0
        %v342 = vadd.f32 0.0, %v341
        %343 = vdwg.mxu0
        %344 = vmatprep.subr.mxu0 0.0
        %345 = vmatpush1.msra.mxu0 %v253
        %346 = vmatprep.subr.mxu0 0.0
        %347 = vmatpush1.msra.mxu0 0.0
        %348 = vmatprep.subr.mxu0 0.0
        %349 = vmatpush1.msra.mxu0 0.0
        %350 = vmatprep.subr.mxu0 0.0
        %351 = vmatpush1.msra.mxu0 0.0
        %352 = vmatprep.subr.mxu0 0.0
        %353 = vmatpush1.msra.mxu0 0.0
        %354 = vmatprep.subr.mxu0 0.0
        %355 = vmatpush1.msra.mxu0 0.0
        %356 = vmatprep.subr.mxu0 0.0
        %357 = vmatpush1.msra.mxu0 0.0
        %358 = vmatprep.subr.mxu0 0.0
        %359 = vmatpush1.msra.mxu0 0.0
        %360 = vmatprep.subr.mxu0 0.0
        %361 = vmatpush1.msra.mxu0 0.0
        %362 = vmatprep.subr.mxu0 0.0
        %363 = vmatpush1.msra.mxu0 0.0
        %364 = vmatprep.subr.mxu0 0.0
        %365 = vmatpush1.msra.mxu0 0.0
        %366 = vmatprep.subr.mxu0 0.0
        %367 = vmatpush1.msra.mxu0 0.0
        %368 = vmatprep.subr.mxu0 0.0
        %369 = vmatpush1.msra.mxu0 0.0
        %370 = vmatprep.subr.mxu0 0.0
        %371 = vmatpush1.msra.mxu0 0.0
        %372 = vmatprep.subr.mxu0 0.0
        %373 = vmatpush1.msra.mxu0 0.0
        %374 = vmatprep.subr.mxu0 0.0
        %375 = vmatpush1.msra.mxu0 0.0
        %376 = vmatprep.subr.mxu0 0.0
        %377 = vmatpush1.msra.mxu0 0.0
        %378 = vmatprep.subr.mxu0 0.0
        %379 = vmatpush1.msra.mxu0 0.0
        %380 = vmatprep.subr.mxu0 0.0
        %381 = vmatpush1.msra.mxu0 0.0
        %382 = vmatprep.subr.mxu0 0.0
        %383 = vmatpush1.msra.mxu0 0.0
        %384 = vmatprep.subr.mxu0 0.0
        %385 = vmatpush1.msra.mxu0 0.0
        %386 = vmatprep.subr.mxu0 0.0
        %387 = vmatpush1.msra.mxu0 0.0
        %388 = vmatprep.subr.mxu0 0.0
        %389 = vmatpush1.msra.mxu0 0.0
        %390 = vmatprep.subr.mxu0 0.0
        %391 = vmatpush1.msra.mxu0 0.0
        %392 = vmatprep.subr.mxu0 0.0
        %393 = vmatpush1.msra.mxu0 0.0
        %394 = vmatprep.subr.mxu0 0.0
        %395 = vmatpush1.msra.mxu0 0.0
        %396 = vmatprep.subr.mxu0 0.0
        %397 = vmatpush1.msra.mxu0 0.0
        %398 = vmatprep.subr.mxu0 0.0
        %399 = vmatpush1.msra.mxu0 0.0
        %400 = vmatprep.subr.mxu0 0.0
        %401 = vmatpush1.msra.mxu0 0.0
        %402 = vmatprep.subr.mxu0 0.0
        %403 = vmatpush1.msra.mxu0 0.0
        %404 = vmatprep.subr.mxu0 0.0
        %405 = vmatpush1.msra.mxu0 0.0
        %406 = vmatprep.subr.mxu0 0.0
        %407 = vmatpush1.msra.mxu0 0.0
        %408 = vmatprep.mubr.f32.mxu0 0.0
        %409 = vmatmul.mubr.f32.gmra.mrb[0].mxu0 %v237
        %v410 = vpop.f32.mrb[0].mxu0
        %v411 = vadd.f32 0.0, %v410
        %v412 = vpop.f32.mrb[0].mxu0
        %413 = vmatprep.mubr.f32.mxu0 0.0
        %414 = vmatmul.mubr.f32.gmra.mrb[0].mxu0 %v240
        %v415 = vpop.f32.mrb[0].mxu0
        %v416 = vadd.f32 0.0, %v415
        %v417 = vpop.f32.mrb[0].mxu0
        %418 = vmatprep.mubr.f32.mxu0 0.0
        %419 = vmatmul.mubr.f32.gmra.mrb[0].mxu0 %v243
        %v420 = vpop.f32.mrb[0].mxu0
        %v421 = vadd.f32 0.0, %v420
        %v422 = vpop.f32.mrb[0].mxu0
        %423 = vmatprep.mubr.f32.mxu0 0.0
        %424 = vmatmul.mubr.f32.gmra.mrb[0].mxu0 %v246
        %v425 = vpop.f32.mrb[0].mxu0
        %v426 = vadd.f32 0.0, %v425
        %v427 = vpop.f32.mrb[0].mxu0
        %428 = vdwg.mxu0
        %429 = vrot.lane.b32.xlu0 %v217, 110
        %v430 = vpop.permute.xlu0 %429
        %431 = vrot.lane.b32.xlu0 %v221, 110
        %v432 = vpop.permute.xlu0 %431
        %433 = vrot.lane.b32.xlu0 %v218, 110
        %v434 = vpop.permute.xlu0 %433
        %435 = vrot.lane.b32.xlu0 %v222, 110
        %v436 = vpop.permute.xlu0 %435
        %vm437 = vcmask 900096
        %v438 = vsel %vm437, %v430, %v432
        %v439 = vsel %vm437, %v432, %v434
        %v440 = vsel %vm437, %v434, %v436
        %v442 = vsel %vm235, %v203, 0
        %v445 = vsel %vm235, %v204, 0
        %v448 = vsel %vm235, %v205, 0
        %v451 = vsel %vm235, %v206, 0
        %v453 = vsel %vm248, %v438, 0
        %v455 = vsel %vm248, %v439, 0
        %v457 = vsel %vm248, %v440, 0
        %459 = vmatprep.subr.mxu0 %v455
        %460 = vmatpush1.msra.mxu0 %v453
        %461 = vmatprep.subr.mxu0 0.0
        %462 = vmatpush1.msra.mxu0 0.0
        %463 = vmatprep.subr.mxu0 0.0
        %464 = vmatpush1.msra.mxu0 0.0
        %465 = vmatprep.subr.mxu0 0.0
        %466 = vmatpush1.msra.mxu0 0.0
        %467 = vmatprep.subr.mxu0 0.0
        %468 = vmatpush1.msra.mxu0 0.0
        %469 = vmatprep.subr.mxu0 0.0
        %470 = vmatpush1.msra.mxu0 0.0
        %471 = vmatprep.subr.mxu0 0.0
        %472 = vmatpush1.msra.mxu0 0.0
        %473 = vmatprep.subr.mxu0 0.0
        %474 = vmatpush1.msra.mxu0 0.0
        %475 = vmatprep.subr.mxu0 0.0
        %476 = vmatpush1.msra.mxu0 0.0
        %477 = vmatprep.subr.mxu0 0.0
        %478 = vmatpush1.msra.mxu0 0.0
        %479 = vmatprep.subr.mxu0 0.0
        %480 = vmatpush1.msra.mxu0 0.0
        %481 = vmatprep.subr.mxu0 0.0
        %482 = vmatpush1.msra.mxu0 0.0
        %483 = vmatprep.subr.mxu0 0.0
        %484 = vmatpush1.msra.mxu0 0.0
        %485 = vmatprep.subr.mxu0 0.0
        %486 = vmatpush1.msra.mxu0 0.0
        %487 = vmatprep.subr.mxu0 0.0
        %488 = vmatpush1.msra.mxu0 0.0
        %489 = vmatprep.subr.mxu0 0.0
        %490 = vmatpush1.msra.mxu0 0.0
        %491 = vmatprep.subr.mxu0 0.0
        %492 = vmatpush1.msra.mxu0 0.0
        %493 = vmatprep.subr.mxu0 0.0
        %494 = vmatpush1.msra.mxu0 0.0
        %495 = vmatprep.subr.mxu0 0.0
        %496 = vmatpush1.msra.mxu0 0.0
        %497 = vmatprep.subr.mxu0 0.0
        %498 = vmatpush1.msra.mxu0 0.0
        %499 = vmatprep.subr.mxu0 0.0
        %500 = vmatpush1.msra.mxu0 0.0
        %501 = vmatprep.subr.mxu0 0.0
        %502 = vmatpush1.msra.mxu0 0.0
        %503 = vmatprep.subr.mxu0 0.0
        %504 = vmatpush1.msra.mxu0 0.0
        %505 = vmatprep.subr.mxu0 0.0
        %506 = vmatpush1.msra.mxu0 0.0
        %507 = vmatprep.subr.mxu0 0.0
        %508 = vmatpush1.msra.mxu0 0.0
        %509 = vmatprep.subr.mxu0 0.0
        %510 = vmatpush1.msra.mxu0 0.0
        %511 = vmatprep.subr.mxu0 0.0
        %512 = vmatpush1.msra.mxu0 0.0
        %513 = vmatprep.subr.mxu0 0.0
        %514 = vmatpush1.msra.mxu0 0.0
        %515 = vmatprep.subr.mxu0 0.0
        %516 = vmatpush1.msra.mxu0 0.0
        %517 = vmatprep.subr.mxu0 0.0
        %518 = vmatpush1.msra.mxu0 0.0
        %519 = vmatprep.subr.mxu0 0.0
        %520 = vmatpush1.msra.mxu0 0.0
        %521 = vmatprep.subr.mxu0 0.0
        %522 = vmatpush1.msra.mxu0 0.0
        %523 = vmatprep.mubr.f32.mxu0 0.0
        %524 = vmatmul.mubr.f32.gmra.mrb[0].mxu0 %v442
        %v525 = vpop.f32.mrb[0].mxu0
        %v526 = vadd.f32 %v322, %v525
        %v527 = vpop.f32.mrb[0].mxu0
        %v528 = vadd.f32 %v324, %v527
        %529 = vmatprep.mubr.f32.mxu0 0.0
        %530 = vmatmul.mubr.f32.gmra.mrb[0].mxu0 %v445
        %v531 = vpop.f32.mrb[0].mxu0
        %v532 = vadd.f32 %v328, %v531
        %v533 = vpop.f32.mrb[0].mxu0
        %v534 = vadd.f32 %v330, %v533
        %535 = vmatprep.mubr.f32.mxu0 0.0
        %536 = vmatmul.mubr.f32.gmra.mrb[0].mxu0 %v448
        %v537 = vpop.f32.mrb[0].mxu0
        %v538 = vadd.f32 %v334, %v537
        %v539 = vpop.f32.mrb[0].mxu0
        %v540 = vadd.f32 %v336, %v539
        %541 = vmatprep.mubr.f32.mxu0 0.0
        %542 = vmatmul.mubr.f32.gmra.mrb[0].mxu0 %v451
        %v543 = vpop.f32.mrb[0].mxu0
        %v544 = vadd.f32 %v340, %v543
        %v545 = vpop.f32.mrb[0].mxu0
        %v546 = vadd.f32 %v342, %v545
        %547 = vdwg.mxu0
        %548 = vmatprep.subr.mxu0 0.0
        %549 = vmatpush1.msra.mxu0 %v457
        %550 = vmatprep.subr.mxu0 0.0
        %551 = vmatpush1.msra.mxu0 0.0
        %552 = vmatprep.subr.mxu0 0.0
        %553 = vmatpush1.msra.mxu0 0.0
        %554 = vmatprep.subr.mxu0 0.0
        %555 = vmatpush1.msra.mxu0 0.0
        %556 = vmatprep.subr.mxu0 0.0
        %557 = vmatpush1.msra.mxu0 0.0
        %558 = vmatprep.subr.mxu0 0.0
        %559 = vmatpush1.msra.mxu0 0.0
        %560 = vmatprep.subr.mxu0 0.0
        %561 = vmatpush1.msra.mxu0 0.0
        %562 = vmatprep.subr.mxu0 0.0
        %563 = vmatpush1.msra.mxu0 0.0
        %564 = vmatprep.subr.mxu0 0.0
        %565 = vmatpush1.msra.mxu0 0.0
        %566 = vmatprep.subr.mxu0 0.0
        %567 = vmatpush1.msra.mxu0 0.0
        %568 = vmatprep.subr.mxu0 0.0
        %569 = vmatpush1.msra.mxu0 0.0
        %570 = vmatprep.subr.mxu0 0.0
        %571 = vmatpush1.msra.mxu0 0.0
        %572 = vmatprep.subr.mxu0 0.0
        %573 = vmatpush1.msra.mxu0 0.0
        %574 = vmatprep.subr.mxu0 0.0
        %575 = vmatpush1.msra.mxu0 0.0
        %576 = vmatprep.subr.mxu0 0.0
        %577 = vmatpush1.msra.mxu0 0.0
        %578 = vmatprep.subr.mxu0 0.0
        %579 = vmatpush1.msra.mxu0 0.0
        %580 = vmatprep.subr.mxu0 0.0
        %581 = vmatpush1.msra.mxu0 0.0
        %582 = vmatprep.subr.mxu0 0.0
        %583 = vmatpush1.msra.mxu0 0.0
        %584 = vmatprep.subr.mxu0 0.0
        %585 = vmatpush1.msra.mxu0 0.0
        %586 = vmatprep.subr.mxu0 0.0
        %587 = vmatpush1.msra.mxu0 0.0
        %588 = vmatprep.subr.mxu0 0.0
        %589 = vmatpush1.msra.mxu0 0.0
        %590 = vmatprep.subr.mxu0 0.0
        %591 = vmatpush1.msra.mxu0 0.0
        %592 = vmatprep.subr.mxu0 0.0
        %593 = vmatpush1.msra.mxu0 0.0
        %594 = vmatprep.subr.mxu0 0.0
        %595 = vmatpush1.msra.mxu0 0.0
        %596 = vmatprep.subr.mxu0 0.0
        %597 = vmatpush1.msra.mxu0 0.0
        %598 = vmatprep.subr.mxu0 0.0
        %599 = vmatpush1.msra.mxu0 0.0
        %600 = vmatprep.subr.mxu0 0.0
        %601 = vmatpush1.msra.mxu0 0.0
        %602 = vmatprep.subr.mxu0 0.0
        %603 = vmatpush1.msra.mxu0 0.0
        %604 = vmatprep.subr.mxu0 0.0
        %605 = vmatpush1.msra.mxu0 0.0
        %606 = vmatprep.subr.mxu0 0.0
        %607 = vmatpush1.msra.mxu0 0.0
        %608 = vmatprep.subr.mxu0 0.0
        %609 = vmatpush1.msra.mxu0 0.0
        %610 = vmatprep.subr.mxu0 0.0
        %611 = vmatpush1.msra.mxu0 0.0
        %612 = vmatprep.mubr.f32.mxu0 0.0
        %613 = vmatmul.mubr.f32.gmra.mrb[0].mxu0 %v442
        %v614 = vpop.f32.mrb[0].mxu0
        %v615 = vadd.f32 %v411, %v614
        %v616 = vpop.f32.mrb[0].mxu0
        %617 = vmatprep.mubr.f32.mxu0 0.0
        %618 = vmatmul.mubr.f32.gmra.mrb[0].mxu0 %v445
        %v619 = vpop.f32.mrb[0].mxu0
        %v620 = vadd.f32 %v416, %v619
        %v621 = vpop.f32.mrb[0].mxu0
        %622 = vmatprep.mubr.f32.mxu0 0.0
        %623 = vmatmul.mubr.f32.gmra.mrb[0].mxu0 %v448
        %v624 = vpop.f32.mrb[0].mxu0
        %v625 = vadd.f32 %v421, %v624
        %v626 = vpop.f32.mrb[0].mxu0
        %627 = vmatprep.mubr.f32.mxu0 0.0
        %628 = vmatmul.mubr.f32.gmra.mrb[0].mxu0 %v451
        %v629 = vpop.f32.mrb[0].mxu0
        %v630 = vadd.f32 %v426, %v629
        %v631 = vpop.f32.mrb[0].mxu0
        %632 = vdwg.mxu0
        %633 = vrot.lane.b32.xlu0 %v217, 108
        %v634 = vpop.permute.xlu0 %633
        %635 = vrot.lane.b32.xlu0 %v221, 108
        %v636 = vpop.permute.xlu0 %635
        %637 = vrot.lane.b32.xlu0 %v218, 108
        %v638 = vpop.permute.xlu0 %637
        %639 = vrot.lane.b32.xlu0 %v222, 108
        %v640 = vpop.permute.xlu0 %639
        %vm641 = vcmask 883712
        %v642 = vsel %vm641, %v634, %v636
        %v643 = vsel %vm641, %v636, %v638
        %v644 = vsel %vm641, %v638, %v640
        %v646 = vsel %vm235, %v213, 0
        %v649 = vsel %vm235, %v214, 0
        %v652 = vsel %vm235, %v215, 0
        %v655 = vsel %vm235, %v216, 0
        %v657 = vsel %vm248, %v642, 0
        %v659 = vsel %vm248, %v643, 0
        %v661 = vsel %vm248, %v644, 0
        %663 = vmatprep.subr.mxu0 %v659
        %664 = vmatpush1.msra.mxu0 %v657
        %665 = vmatprep.subr.mxu0 0.0
        %666 = vmatpush1.msra.mxu0 0.0
        %667 = vmatprep.subr.mxu0 0.0
        %668 = vmatpush1.msra.mxu0 0.0
        %669 = vmatprep.subr.mxu0 0.0
        %670 = vmatpush1.msra.mxu0 0.0
        %671 = vmatprep.subr.mxu0 0.0
        %672 = vmatpush1.msra.mxu0 0.0
        %673 = vmatprep.subr.mxu0 0.0
        %674 = vmatpush1.msra.mxu0 0.0
        %675 = vmatprep.subr.mxu0 0.0
        %676 = vmatpush1.msra.mxu0 0.0
        %677 = vmatprep.subr.mxu0 0.0
        %678 = vmatpush1.msra.mxu0 0.0
        %679 = vmatprep.subr.mxu0 0.0
        %680 = vmatpush1.msra.mxu0 0.0
        %681 = vmatprep.subr.mxu0 0.0
        %682 = vmatpush1.msra.mxu0 0.0
        %683 = vmatprep.subr.mxu0 0.0
        %684 = vmatpush1.msra.mxu0 0.0
        %685 = vmatprep.subr.mxu0 0.0
        %686 = vmatpush1.msra.mxu0 0.0
        %687 = vmatprep.subr.mxu0 0.0
        %688 = vmatpush1.msra.mxu0 0.0
        %689 = vmatprep.subr.mxu0 0.0
        %690 = vmatpush1.msra.mxu0 0.0
        %691 = vmatprep.subr.mxu0 0.0
        %692 = vmatpush1.msra.mxu0 0.0
        %693 = vmatprep.subr.mxu0 0.0
        %694 = vmatpush1.msra.mxu0 0.0
        %695 = vmatprep.subr.mxu0 0.0
        %696 = vmatpush1.msra.mxu0 0.0
        %697 = vmatprep.subr.mxu0 0.0
        %698 = vmatpush1.msra.mxu0 0.0
        %699 = vmatprep.subr.mxu0 0.0
        %700 = vmatpush1.msra.mxu0 0.0
        %701 = vmatprep.subr.mxu0 0.0
        %702 = vmatpush1.msra.mxu0 0.0
        %703 = vmatprep.subr.mxu0 0.0
        %704 = vmatpush1.msra.mxu0 0.0
        %705 = vmatprep.subr.mxu0 0.0
        %706 = vmatpush1.msra.mxu0 0.0
        %707 = vmatprep.subr.mxu0 0.0
        %708 = vmatpush1.msra.mxu0 0.0
        %709 = vmatprep.subr.mxu0 0.0
        %710 = vmatpush1.msra.mxu0 0.0
        %711 = vmatprep.subr.mxu0 0.0
        %712 = vmatpush1.msra.mxu0 0.0
        %713 = vmatprep.subr.mxu0 0.0
        %714 = vmatpush1.msra.mxu0 0.0
        %715 = vmatprep.subr.mxu0 0.0
        %716 = vmatpush1.msra.mxu0 0.0
        %717 = vmatprep.subr.mxu0 0.0
        %718 = vmatpush1.msra.mxu0 0.0
        %719 = vmatprep.subr.mxu0 0.0
        %720 = vmatpush1.msra.mxu0 0.0
        %721 = vmatprep.subr.mxu0 0.0
        %722 = vmatpush1.msra.mxu0 0.0
        %723 = vmatprep.subr.mxu0 0.0
        %724 = vmatpush1.msra.mxu0 0.0
        %725 = vmatprep.subr.mxu0 0.0
        %726 = vmatpush1.msra.mxu0 0.0
        %727 = vmatprep.mubr.f32.mxu0 0.0
        %728 = vmatmul.mubr.f32.gmra.mrb[0].mxu0 %v646
        %v729 = vpop.f32.mrb[0].mxu0
        %v730 = vadd.f32 0.0, %v729
        %v731 = vpop.f32.mrb[0].mxu0
        %v732 = vadd.f32 0.0, %v731
        %733 = vmatprep.mubr.f32.mxu0 0.0
        %734 = vmatmul.mubr.f32.gmra.mrb[0].mxu0 %v649
        %v735 = vpop.f32.mrb[0].mxu0
        %v736 = vadd.f32 0.0, %v735
        %v737 = vpop.f32.mrb[0].mxu0
        %v738 = vadd.f32 0.0, %v737
        %739 = vmatprep.mubr.f32.mxu0 0.0
        %740 = vmatmul.mubr.f32.gmra.mrb[0].mxu0 %v652
        %v741 = vpop.f32.mrb[0].mxu0
        %v742 = vadd.f32 0.0, %v741
        %v743 = vpop.f32.mrb[0].mxu0
        %v744 = vadd.f32 0.0, %v743
        %745 = vmatprep.mubr.f32.mxu0 0.0
        %746 = vmatmul.mubr.f32.gmra.mrb[0].mxu0 %v655
        %v747 = vpop.f32.mrb[0].mxu0
        %v748 = vadd.f32 0.0, %v747
        %v749 = vpop.f32.mrb[0].mxu0
        %v750 = vadd.f32 0.0, %v749
        %751 = vdwg.mxu0
        %752 = vmatprep.subr.mxu0 0.0
        %753 = vmatpush1.msra.mxu0 %v661
        %754 = vmatprep.subr.mxu0 0.0
        %755 = vmatpush1.msra.mxu0 0.0
        %756 = vmatprep.subr.mxu0 0.0
        %757 = vmatpush1.msra.mxu0 0.0
        %758 = vmatprep.subr.mxu0 0.0
        %759 = vmatpush1.msra.mxu0 0.0
        %760 = vmatprep.subr.mxu0 0.0
        %761 = vmatpush1.msra.mxu0 0.0
        %762 = vmatprep.subr.mxu0 0.0
        %763 = vmatpush1.msra.mxu0 0.0
        %764 = vmatprep.subr.mxu0 0.0
        %765 = vmatpush1.msra.mxu0 0.0
        %766 = vmatprep.subr.mxu0 0.0
        %767 = vmatpush1.msra.mxu0 0.0
        %768 = vmatprep.subr.mxu0 0.0
        %769 = vmatpush1.msra.mxu0 0.0
        %770 = vmatprep.subr.mxu0 0.0
        %771 = vmatpush1.msra.mxu0 0.0
        %772 = vmatprep.subr.mxu0 0.0
        %773 = vmatpush1.msra.mxu0 0.0
        %774 = vmatprep.subr.mxu0 0.0
        %775 = vmatpush1.msra.mxu0 0.0
        %776 = vmatprep.subr.mxu0 0.0
        %777 = vmatpush1.msra.mxu0 0.0
        %778 = vmatprep.subr.mxu0 0.0
        %779 = vmatpush1.msra.mxu0 0.0
        %780 = vmatprep.subr.mxu0 0.0
        %781 = vmatpush1.msra.mxu0 0.0
        %782 = vmatprep.subr.mxu0 0.0
        %783 = vmatpush1.msra.mxu0 0.0
        %784 = vmatprep.subr.mxu0 0.0
        %785 = vmatpush1.msra.mxu0 0.0
        %786 = vmatprep.subr.mxu0 0.0
        %787 = vmatpush1.msra.mxu0 0.0
        %788 = vmatprep.subr.mxu0 0.0
        %789 = vmatpush1.msra.mxu0 0.0
        %790 = vmatprep.subr.mxu0 0.0
        %791 = vmatpush1.msra.mxu0 0.0
        %792 = vmatprep.subr.mxu0 0.0
        %793 = vmatpush1.msra.mxu0 0.0
        %794 = vmatprep.subr.mxu0 0.0
        %795 = vmatpush1.msra.mxu0 0.0
        %796 = vmatprep.subr.mxu0 0.0
        %797 = vmatpush1.msra.mxu0 0.0
        %798 = vmatprep.subr.mxu0 0.0
        %799 = vmatpush1.msra.mxu0 0.0
        %800 = vmatprep.subr.mxu0 0.0
        %801 = vmatpush1.msra.mxu0 0.0
        %802 = vmatprep.subr.mxu0 0.0
        %803 = vmatpush1.msra.mxu0 0.0
        %804 = vmatprep.subr.mxu0 0.0
        %805 = vmatpush1.msra.mxu0 0.0
        %806 = vmatprep.subr.mxu0 0.0
        %807 = vmatpush1.msra.mxu0 0.0
        %808 = vmatprep.subr.mxu0 0.0
        %809 = vmatpush1.msra.mxu0 0.0
        %810 = vmatprep.subr.mxu0 0.0
        %811 = vmatpush1.msra.mxu0 0.0
        %812 = vmatprep.subr.mxu0 0.0
        %813 = vmatpush1.msra.mxu0 0.0
        %814 = vmatprep.subr.mxu0 0.0
        %815 = vmatpush1.msra.mxu0 0.0
        %816 = vmatprep.mubr.f32.mxu0 0.0
        %817 = vmatmul.mubr.f32.gmra.mrb[0].mxu0 %v646
        %v818 = vpop.f32.mrb[0].mxu0
        %v819 = vadd.f32 0.0, %v818
        %v820 = vpop.f32.mrb[0].mxu0
        %821 = vmatprep.mubr.f32.mxu0 0.0
        %822 = vmatmul.mubr.f32.gmra.mrb[0].mxu0 %v649
        %v823 = vpop.f32.mrb[0].mxu0
        %v824 = vadd.f32 0.0, %v823
        %v825 = vpop.f32.mrb[0].mxu0
        %826 = vmatprep.mubr.f32.mxu0 0.0
        %827 = vmatmul.mubr.f32.gmra.mrb[0].mxu0 %v652
        %v828 = vpop.f32.mrb[0].mxu0
        %v829 = vadd.f32 0.0, %v828
        %v830 = vpop.f32.mrb[0].mxu0
        %831 = vmatprep.mubr.f32.mxu0 0.0
        %832 = vmatmul.mubr.f32.gmra.mrb[0].mxu0 %v655
        %v833 = vpop.f32.mrb[0].mxu0
        %v834 = vadd.f32 0.0, %v833
        %v835 = vpop.f32.mrb[0].mxu0
        %836 = vdwg.mxu0
        %v837 = vadd.f32 %v526, %v730
        %v838 = vadd.f32 %v528, %v732
        %v839 = vadd.f32 %v615, %v819
        %v840 = vadd.f32 %v532, %v736
        %v841 = vadd.f32 %v534, %v738
        %v842 = vadd.f32 %v620, %v824
        %v843 = vadd.f32 %v538, %v742
        %v844 = vadd.f32 %v540, %v744
        %v845 = vadd.f32 %v625, %v829
        %v846 = vadd.f32 %v544, %v748
        %v847 = vadd.f32 %v546, %v750
        %v848 = vadd.f32 %v630, %v834
        %850 = vset.pattern.permute.xlu0 0
        %851 = vperm.xlu0 %850, %v199
        %v852 = vpop.permute.xlu0 %851
        %855 = vset.pattern.permute.xlu0 0
        %856 = vperm.xlu0 %855, %v200
        %v857 = vpop.permute.xlu0 %856
        %860 = vset.pattern.permute.xlu0 0
        %861 = vperm.xlu0 %860, %v201
        %v862 = vpop.permute.xlu0 %861
        %865 = vset.pattern.permute.xlu0 0
        %866 = vperm.xlu0 %865, %v202
        %v867 = vpop.permute.xlu0 %866
        %v869 = vadd.f32 %v837, %v852
        %v870 = vadd.f32 %v838, %v852
        %v871 = vadd.f32 %v839, %v852
        %v872 = vadd.f32 %v840, %v857
        %v873 = vadd.f32 %v841, %v857
        %v874 = vadd.f32 %v842, %v857
        %v875 = vadd.f32 %v843, %v862
        %v876 = vadd.f32 %v844, %v862
        %v877 = vadd.f32 %v845, %v862
        %v878 = vadd.f32 %v846, %v867
        %v879 = vadd.f32 %v847, %v867
        %v880 = vadd.f32 %v848, %v867
        %881 = vst [vmem:[%s198] sm:$0xff] %v869
        %882 = vst [vmem:[%s198 + $0x8] sm:$0xff] %v870
        %883 = vst [vmem:[%s198 + $0x10] sm:$0xff] %v871
        %884 = vst [vmem:[%s198 + $0x18] sm:$0xff] %v872
        %885 = vst [vmem:[%s198 + $0x20] sm:$0xff] %v873
        %886 = vst [vmem:[%s198 + $0x28] sm:$0xff] %v874
        %887 = vst [vmem:[%s198 + $0x30] sm:$0xff] %v875
        %888 = vst [vmem:[%s198 + $0x38] sm:$0xff] %v876
        %889 = vst [vmem:[%s198 + $0x40] sm:$0xff] %v877
        %890 = vst [vmem:[%s198 + $0x48] sm:$0xff] %v878
        %891 = vst [vmem:[%s198 + $0x50] sm:$0xff] %v879
        %892 = vst [vmem:[%s198 + $0x58] sm:$0xff] %v880
        %s893 = scalar_lea.vmem %s179, 16 [#allocation2]
        %v894 = vld [vmem:[%s893] sm:$0xff]
        %v895 = vld [vmem:[%s893 + $0x8] sm:$0xff]
        %v898 = vcombine.high %v894, %v894
        %v899 = vcombine.high %v895, %v895
        %900 = vrot.lane.b32.xlu0 %v894, 109
        %v901 = vpop.permute.xlu0 %900
        %902 = vrot.lane.b32.xlu0 %v898, 109
        %v903 = vpop.permute.xlu0 %902
        %904 = vrot.lane.b32.xlu0 %v895, 109
        %v905 = vpop.permute.xlu0 %904
        %906 = vrot.lane.b32.xlu0 %v899, 109
        %v907 = vpop.permute.xlu0 %906
        %v908 = vsel %vm231, %v901, %v903
        %v909 = vsel %vm231, %v903, %v905
        %v910 = vsel %vm231, %v905, %v907
        %v911 = vsel %vm248, %v908, 0
        %v913 = vsel %vm248, %v909, 0
        %v915 = vsel %vm248, %v910, 0
        %917 = vmatprep.subr.mxu0 %v913
        %918 = vmatpush1.msra.mxu0 %v911
        %919 = vmatprep.subr.mxu0 0.0
        %920 = vmatpush1.msra.mxu0 0.0
        %921 = vmatprep.subr.mxu0 0.0
        %922 = vmatpush1.msra.mxu0 0.0
        %923 = vmatprep.subr.mxu0 0.0
        %924 = vmatpush1.msra.mxu0 0.0
        %925 = vmatprep.subr.mxu0 0.0
        %926 = vmatpush1.msra.mxu0 0.0
        %927 = vmatprep.subr.mxu0 0.0
        %928 = vmatpush1.msra.mxu0 0.0
        %929 = vmatprep.subr.mxu0 0.0
        %930 = vmatpush1.msra.mxu0 0.0
        %931 = vmatprep.subr.mxu0 0.0
        %932 = vmatpush1.msra.mxu0 0.0
        %933 = vmatprep.subr.mxu0 0.0
        %934 = vmatpush1.msra.mxu0 0.0
        %935 = vmatprep.subr.mxu0 0.0
        %936 = vmatpush1.msra.mxu0 0.0
        %937 = vmatprep.subr.mxu0 0.0
        %938 = vmatpush1.msra.mxu0 0.0
        %939 = vmatprep.subr.mxu0 0.0
        %940 = vmatpush1.msra.mxu0 0.0
        %941 = vmatprep.subr.mxu0 0.0
        %942 = vmatpush1.msra.mxu0 0.0
        %943 = vmatprep.subr.mxu0 0.0
        %944 = vmatpush1.msra.mxu0 0.0
        %945 = vmatprep.subr.mxu0 0.0
        %946 = vmatpush1.msra.mxu0 0.0
        %947 = vmatprep.subr.mxu0 0.0
        %948 = vmatpush1.msra.mxu0 0.0
        %949 = vmatprep.subr.mxu0 0.0
        %950 = vmatpush1.msra.mxu0 0.0
        %951 = vmatprep.subr.mxu0 0.0
        %952 = vmatpush1.msra.mxu0 0.0
        %953 = vmatprep.subr.mxu0 0.0
        %954 = vmatpush1.msra.mxu0 0.0
        %955 = vmatprep.subr.mxu0 0.0
        %956 = vmatpush1.msra.mxu0 0.0
        %957 = vmatprep.subr.mxu0 0.0
        %958 = vmatpush1.msra.mxu0 0.0
        %959 = vmatprep.subr.mxu0 0.0
        %960 = vmatpush1.msra.mxu0 0.0
        %961 = vmatprep.subr.mxu0 0.0
        %962 = vmatpush1.msra.mxu0 0.0
        %963 = vmatprep.subr.mxu0 0.0
        %964 = vmatpush1.msra.mxu0 0.0
        %965 = vmatprep.subr.mxu0 0.0
        %966 = vmatpush1.msra.mxu0 0.0
        %967 = vmatprep.subr.mxu0 0.0
        %968 = vmatpush1.msra.mxu0 0.0
        %969 = vmatprep.subr.mxu0 0.0
        %970 = vmatpush1.msra.mxu0 0.0
        %971 = vmatprep.subr.mxu0 0.0
        %972 = vmatpush1.msra.mxu0 0.0
        %973 = vmatprep.subr.mxu0 0.0
        %974 = vmatpush1.msra.mxu0 0.0
        %975 = vmatprep.subr.mxu0 0.0
        %976 = vmatpush1.msra.mxu0 0.0
        %977 = vmatprep.subr.mxu0 0.0
        %978 = vmatpush1.msra.mxu0 0.0
        %979 = vmatprep.subr.mxu0 0.0
        %980 = vmatpush1.msra.mxu0 0.0
        %981 = vmatprep.mubr.f32.mxu0 0.0
        %982 = vmatmul.mubr.f32.gmra.mrb[0].mxu0 %v237
        %v983 = vpop.f32.mrb[0].mxu0
        %v984 = vadd.f32 0.0, %v983
        %v985 = vpop.f32.mrb[0].mxu0
        %v986 = vadd.f32 0.0, %v985
        %987 = vmatprep.mubr.f32.mxu0 0.0
        %988 = vmatmul.mubr.f32.gmra.mrb[0].mxu0 %v240
        %v989 = vpop.f32.mrb[0].mxu0
        %v990 = vadd.f32 0.0, %v989
        %v991 = vpop.f32.mrb[0].mxu0
        %v992 = vadd.f32 0.0, %v991
        %993 = vmatprep.mubr.f32.mxu0 0.0
        %994 = vmatmul.mubr.f32.gmra.mrb[0].mxu0 %v243
        %v995 = vpop.f32.mrb[0].mxu0
        %v996 = vadd.f32 0.0, %v995
        %v997 = vpop.f32.mrb[0].mxu0
        %v998 = vadd.f32 0.0, %v997
        %999 = vmatprep.mubr.f32.mxu0 0.0
        %1000 = vmatmul.mubr.f32.gmra.mrb[0].mxu0 %v246
        %v1001 = vpop.f32.mrb[0].mxu0
        %v1002 = vadd.f32 0.0, %v1001
        %v1003 = vpop.f32.mrb[0].mxu0
        %v1004 = vadd.f32 0.0, %v1003
        %1005 = vdwg.mxu0
        %1006 = vmatprep.subr.mxu0 0.0
        %1007 = vmatpush1.msra.mxu0 %v915
        %1008 = vmatprep.subr.mxu0 0.0
        %1009 = vmatpush1.msra.mxu0 0.0
        %1010 = vmatprep.subr.mxu0 0.0
        %1011 = vmatpush1.msra.mxu0 0.0
        %1012 = vmatprep.subr.mxu0 0.0
        %1013 = vmatpush1.msra.mxu0 0.0
        %1014 = vmatprep.subr.mxu0 0.0
        %1015 = vmatpush1.msra.mxu0 0.0
        %1016 = vmatprep.subr.mxu0 0.0
        %1017 = vmatpush1.msra.mxu0 0.0
        %1018 = vmatprep.subr.mxu0 0.0
        %1019 = vmatpush1.msra.mxu0 0.0
        %1020 = vmatprep.subr.mxu0 0.0
        %1021 = vmatpush1.msra.mxu0 0.0
        %1022 = vmatprep.subr.mxu0 0.0
        %1023 = vmatpush1.msra.mxu0 0.0
        %1024 = vmatprep.subr.mxu0 0.0
        %1025 = vmatpush1.msra.mxu0 0.0
        %1026 = vmatprep.subr.mxu0 0.0
        %1027 = vmatpush1.msra.mxu0 0.0
        %1028 = vmatprep.subr.mxu0 0.0
        %1029 = vmatpush1.msra.mxu0 0.0
        %1030 = vmatprep.subr.mxu0 0.0
        %1031 = vmatpush1.msra.mxu0 0.0
        %1032 = vmatprep.subr.mxu0 0.0
        %1033 = vmatpush1.msra.mxu0 0.0
        %1034 = vmatprep.subr.mxu0 0.0
        %1035 = vmatpush1.msra.mxu0 0.0
        %1036 = vmatprep.subr.mxu0 0.0
        %1037 = vmatpush1.msra.mxu0 0.0
        %1038 = vmatprep.subr.mxu0 0.0
        %1039 = vmatpush1.msra.mxu0 0.0
        %1040 = vmatprep.subr.mxu0 0.0
        %1041 = vmatpush1.msra.mxu0 0.0
        %1042 = vmatprep.subr.mxu0 0.0
        %1043 = vmatpush1.msra.mxu0 0.0
        %1044 = vmatprep.subr.mxu0 0.0
        %1045 = vmatpush1.msra.mxu0 0.0
        %1046 = vmatprep.subr.mxu0 0.0
        %1047 = vmatpush1.msra.mxu0 0.0
        %1048 = vmatprep.subr.mxu0 0.0
        %1049 = vmatpush1.msra.mxu0 0.0
        %1050 = vmatprep.subr.mxu0 0.0
        %1051 = vmatpush1.msra.mxu0 0.0
        %1052 = vmatprep.subr.mxu0 0.0
        %1053 = vmatpush1.msra.mxu0 0.0
        %1054 = vmatprep.subr.mxu0 0.0
        %1055 = vmatpush1.msra.mxu0 0.0
        %1056 = vmatprep.subr.mxu0 0.0
        %1057 = vmatpush1.msra.mxu0 0.0
        %1058 = vmatprep.subr.mxu0 0.0
        %1059 = vmatpush1.msra.mxu0 0.0
        %1060 = vmatprep.subr.mxu0 0.0
        %1061 = vmatpush1.msra.mxu0 0.0
        %1062 = vmatprep.subr.mxu0 0.0
        %1063 = vmatpush1.msra.mxu0 0.0
        %1064 = vmatprep.subr.mxu0 0.0
        %1065 = vmatpush1.msra.mxu0 0.0
        %1066 = vmatprep.subr.mxu0 0.0
        %1067 = vmatpush1.msra.mxu0 0.0
        %1068 = vmatprep.subr.mxu0 0.0
        %1069 = vmatpush1.msra.mxu0 0.0
        %1070 = vmatprep.mubr.f32.mxu0 0.0
        %1071 = vmatmul.mubr.f32.gmra.mrb[0].mxu0 %v237
        %v1072 = vpop.f32.mrb[0].mxu0
        %v1073 = vadd.f32 0.0, %v1072
        %v1074 = vpop.f32.mrb[0].mxu0
        %1075 = vmatprep.mubr.f32.mxu0 0.0
        %1076 = vmatmul.mubr.f32.gmra.mrb[0].mxu0 %v240
        %v1077 = vpop.f32.mrb[0].mxu0
        %v1078 = vadd.f32 0.0, %v1077
        %v1079 = vpop.f32.mrb[0].mxu0
        %1080 = vmatprep.mubr.f32.mxu0 0.0
        %1081 = vmatmul.mubr.f32.gmra.mrb[0].mxu0 %v243
        %v1082 = vpop.f32.mrb[0].mxu0
        %v1083 = vadd.f32 0.0, %v1082
        %v1084 = vpop.f32.mrb[0].mxu0
        %1085 = vmatprep.mubr.f32.mxu0 0.0
        %1086 = vmatmul.mubr.f32.gmra.mrb[0].mxu0 %v246
        %v1087 = vpop.f32.mrb[0].mxu0
        %v1088 = vadd.f32 0.0, %v1087
        %v1089 = vpop.f32.mrb[0].mxu0
        %1090 = vdwg.mxu0
        %1091 = vrot.lane.b32.xlu0 %v894, 127
        %v1092 = vpop.permute.xlu0 %1091
        %1093 = vrot.lane.b32.xlu0 %v898, 127
        %v1094 = vpop.permute.xlu0 %1093
        %1095 = vrot.lane.b32.xlu0 %v895, 127
        %v1096 = vpop.permute.xlu0 %1095
        %1097 = vrot.lane.b32.xlu0 %v899, 127
        %v1098 = vpop.permute.xlu0 %1097
        %vm1099 = vcmask 1039360
        %v1100 = vsel %vm1099, %v1092, %v1094
        %v1101 = vsel %vm1099, %v1094, %v1096
        %v1102 = vsel %vm1099, %v1096, %v1098
        %v1103 = vsel %vm248, %v1100, 0
        %v1105 = vsel %vm248, %v1101, 0
        %v1107 = vsel %vm248, %v1102, 0
        %1109 = vmatprep.subr.mxu0 %v1105
        %1110 = vmatpush1.msra.mxu0 %v1103
        %1111 = vmatprep.subr.mxu0 0.0
        %1112 = vmatpush1.msra.mxu0 0.0
        %1113 = vmatprep.subr.mxu0 0.0
        %1114 = vmatpush1.msra.mxu0 0.0
        %1115 = vmatprep.subr.mxu0 0.0
        %1116 = vmatpush1.msra.mxu0 0.0
        %1117 = vmatprep.subr.mxu0 0.0
        %1118 = vmatpush1.msra.mxu0 0.0
        %1119 = vmatprep.subr.mxu0 0.0
        %1120 = vmatpush1.msra.mxu0 0.0
        %1121 = vmatprep.subr.mxu0 0.0
        %1122 = vmatpush1.msra.mxu0 0.0
        %1123 = vmatprep.subr.mxu0 0.0
        %1124 = vmatpush1.msra.mxu0 0.0
        %1125 = vmatprep.subr.mxu0 0.0
        %1126 = vmatpush1.msra.mxu0 0.0
        %1127 = vmatprep.subr.mxu0 0.0
        %1128 = vmatpush1.msra.mxu0 0.0
        %1129 = vmatprep.subr.mxu0 0.0
        %1130 = vmatpush1.msra.mxu0 0.0
        %1131 = vmatprep.subr.mxu0 0.0
        %1132 = vmatpush1.msra.mxu0 0.0
        %1133 = vmatprep.subr.mxu0 0.0
        %1134 = vmatpush1.msra.mxu0 0.0
        %1135 = vmatprep.subr.mxu0 0.0
        %1136 = vmatpush1.msra.mxu0 0.0
        %1137 = vmatprep.subr.mxu0 0.0
        %1138 = vmatpush1.msra.mxu0 0.0
        %1139 = vmatprep.subr.mxu0 0.0
        %1140 = vmatpush1.msra.mxu0 0.0
        %1141 = vmatprep.subr.mxu0 0.0
        %1142 = vmatpush1.msra.mxu0 0.0
        %1143 = vmatprep.subr.mxu0 0.0
        %1144 = vmatpush1.msra.mxu0 0.0
        %1145 = vmatprep.subr.mxu0 0.0
        %1146 = vmatpush1.msra.mxu0 0.0
        %1147 = vmatprep.subr.mxu0 0.0
        %1148 = vmatpush1.msra.mxu0 0.0
        %1149 = vmatprep.subr.mxu0 0.0
        %1150 = vmatpush1.msra.mxu0 0.0
        %1151 = vmatprep.subr.mxu0 0.0
        %1152 = vmatpush1.msra.mxu0 0.0
        %1153 = vmatprep.subr.mxu0 0.0
        %1154 = vmatpush1.msra.mxu0 0.0
        %1155 = vmatprep.subr.mxu0 0.0
        %1156 = vmatpush1.msra.mxu0 0.0
        %1157 = vmatprep.subr.mxu0 0.0
        %1158 = vmatpush1.msra.mxu0 0.0
        %1159 = vmatprep.subr.mxu0 0.0
        %1160 = vmatpush1.msra.mxu0 0.0
        %1161 = vmatprep.subr.mxu0 0.0
        %1162 = vmatpush1.msra.mxu0 0.0
        %1163 = vmatprep.subr.mxu0 0.0
        %1164 = vmatpush1.msra.mxu0 0.0
        %1165 = vmatprep.subr.mxu0 0.0
        %1166 = vmatpush1.msra.mxu0 0.0
        %1167 = vmatprep.subr.mxu0 0.0
        %1168 = vmatpush1.msra.mxu0 0.0
        %1169 = vmatprep.subr.mxu0 0.0
        %1170 = vmatpush1.msra.mxu0 0.0
        %1171 = vmatprep.subr.mxu0 0.0
        %1172 = vmatpush1.msra.mxu0 0.0
        %1173 = vmatprep.mubr.f32.mxu0 0.0
        %1174 = vmatmul.mubr.f32.gmra.mrb[0].mxu0 %v442
        %v1175 = vpop.f32.mrb[0].mxu0
        %v1176 = vadd.f32 %v984, %v1175
        %v1177 = vpop.f32.mrb[0].mxu0
        %v1178 = vadd.f32 %v986, %v1177
        %1179 = vmatprep.mubr.f32.mxu0 0.0
        %1180 = vmatmul.mubr.f32.gmra.mrb[0].mxu0 %v445
        %v1181 = vpop.f32.mrb[0].mxu0
        %v1182 = vadd.f32 %v990, %v1181
        %v1183 = vpop.f32.mrb[0].mxu0
        %v1184 = vadd.f32 %v992, %v1183
        %1185 = vmatprep.mubr.f32.mxu0 0.0
        %1186 = vmatmul.mubr.f32.gmra.mrb[0].mxu0 %v448
        %v1187 = vpop.f32.mrb[0].mxu0
        %v1188 = vadd.f32 %v996, %v1187
        %v1189 = vpop.f32.mrb[0].mxu0
        %v1190 = vadd.f32 %v998, %v1189
        %1191 = vmatprep.mubr.f32.mxu0 0.0
        %1192 = vmatmul.mubr.f32.gmra.mrb[0].mxu0 %v451
        %v1193 = vpop.f32.mrb[0].mxu0
        %v1194 = vadd.f32 %v1002, %v1193
        %v1195 = vpop.f32.mrb[0].mxu0
        %v1196 = vadd.f32 %v1004, %v1195
        %1197 = vdwg.mxu0
        %1198 = vmatprep.subr.mxu0 0.0
        %1199 = vmatpush1.msra.mxu0 %v1107
        %1200 = vmatprep.subr.mxu0 0.0
        %1201 = vmatpush1.msra.mxu0 0.0
        %1202 = vmatprep.subr.mxu0 0.0
        %1203 = vmatpush1.msra.mxu0 0.0
        %1204 = vmatprep.subr.mxu0 0.0
        %1205 = vmatpush1.msra.mxu0 0.0
        %1206 = vmatprep.subr.mxu0 0.0
        %1207 = vmatpush1.msra.mxu0 0.0
        %1208 = vmatprep.subr.mxu0 0.0
        %1209 = vmatpush1.msra.mxu0 0.0
        %1210 = vmatprep.subr.mxu0 0.0
        %1211 = vmatpush1.msra.mxu0 0.0
        %1212 = vmatprep.subr.mxu0 0.0
        %1213 = vmatpush1.msra.mxu0 0.0
        %1214 = vmatprep.subr.mxu0 0.0
        %1215 = vmatpush1.msra.mxu0 0.0
        %1216 = vmatprep.subr.mxu0 0.0
        %1217 = vmatpush1.msra.mxu0 0.0
        %1218 = vmatprep.subr.mxu0 0.0
        %1219 = vmatpush1.msra.mxu0 0.0
        %1220 = vmatprep.subr.mxu0 0.0
        %1221 = vmatpush1.msra.mxu0 0.0
        %1222 = vmatprep.subr.mxu0 0.0
        %1223 = vmatpush1.msra.mxu0 0.0
        %1224 = vmatprep.subr.mxu0 0.0
        %1225 = vmatpush1.msra.mxu0 0.0
        %1226 = vmatprep.subr.mxu0 0.0
        %1227 = vmatpush1.msra.mxu0 0.0
        %1228 = vmatprep.subr.mxu0 0.0
        %1229 = vmatpush1.msra.mxu0 0.0
        %1230 = vmatprep.subr.mxu0 0.0
        %1231 = vmatpush1.msra.mxu0 0.0
        %1232 = vmatprep.subr.mxu0 0.0
        %1233 = vmatpush1.msra.mxu0 0.0
        %1234 = vmatprep.subr.mxu0 0.0
        %1235 = vmatpush1.msra.mxu0 0.0
        %1236 = vmatprep.subr.mxu0 0.0
        %1237 = vmatpush1.msra.mxu0 0.0
        %1238 = vmatprep.subr.mxu0 0.0
        %1239 = vmatpush1.msra.mxu0 0.0
        %1240 = vmatprep.subr.mxu0 0.0
        %1241 = vmatpush1.msra.mxu0 0.0
        %1242 = vmatprep.subr.mxu0 0.0
        %1243 = vmatpush1.msra.mxu0 0.0
        %1244 = vmatprep.subr.mxu0 0.0
        %1245 = vmatpush1.msra.mxu0 0.0
        %1246 = vmatprep.subr.mxu0 0.0
        %1247 = vmatpush1.msra.mxu0 0.0
        %1248 = vmatprep.subr.mxu0 0.0
        %1249 = vmatpush1.msra.mxu0 0.0
        %1250 = vmatprep.subr.mxu0 0.0
        %1251 = vmatpush1.msra.mxu0 0.0
        %1252 = vmatprep.subr.mxu0 0.0
        %1253 = vmatpush1.msra.mxu0 0.0
        %1254 = vmatprep.subr.mxu0 0.0
        %1255 = vmatpush1.msra.mxu0 0.0
        %1256 = vmatprep.subr.mxu0 0.0
        %1257 = vmatpush1.msra.mxu0 0.0
        %1258 = vmatprep.subr.mxu0 0.0
        %1259 = vmatpush1.msra.mxu0 0.0
        %1260 = vmatprep.subr.mxu0 0.0
        %1261 = vmatpush1.msra.mxu0 0.0
        %1262 = vmatprep.mubr.f32.mxu0 0.0
        %1263 = vmatmul.mubr.f32.gmra.mrb[0].mxu0 %v442
        %v1264 = vpop.f32.mrb[0].mxu0
        %v1265 = vadd.f32 %v1073, %v1264
        %v1266 = vpop.f32.mrb[0].mxu0
        %1267 = vmatprep.mubr.f32.mxu0 0.0
        %1268 = vmatmul.mubr.f32.gmra.mrb[0].mxu0 %v445
        %v1269 = vpop.f32.mrb[0].mxu0
        %v1270 = vadd.f32 %v1078, %v1269
        %v1271 = vpop.f32.mrb[0].mxu0
        %1272 = vmatprep.mubr.f32.mxu0 0.0
        %1273 = vmatmul.mubr.f32.gmra.mrb[0].mxu0 %v448
        %v1274 = vpop.f32.mrb[0].mxu0
        %v1275 = vadd.f32 %v1083, %v1274
        %v1276 = vpop.f32.mrb[0].mxu0
        %1277 = vmatprep.mubr.f32.mxu0 0.0
        %1278 = vmatmul.mubr.f32.gmra.mrb[0].mxu0 %v451
        %v1279 = vpop.f32.mrb[0].mxu0
        %v1280 = vadd.f32 %v1088, %v1279
        %v1281 = vpop.f32.mrb[0].mxu0
        %1282 = vdwg.mxu0
        %1283 = vrot.lane.b32.xlu0 %v894, 91
        %v1284 = vpop.permute.xlu0 %1283
        %1285 = vrot.lane.b32.xlu0 %v898, 91
        %v1286 = vpop.permute.xlu0 %1285
        %1287 = vrot.lane.b32.xlu0 %v895, 91
        %v1288 = vpop.permute.xlu0 %1287
        %1289 = vrot.lane.b32.xlu0 %v899, 91
        %v1290 = vpop.permute.xlu0 %1289
        %vm1291 = vcmask 744448
        %v1292 = vsel %vm1291, %v1284, %v1286
        %v1293 = vsel %vm1291, %v1286, %v1288
        %v1294 = vsel %vm1291, %v1288, %v1290
        %v1295 = vsel %vm248, %v1292, 0
        %v1297 = vsel %vm248, %v1293, 0
        %v1299 = vsel %vm248, %v1294, 0
        %1301 = vmatprep.subr.mxu0 %v1297
        %1302 = vmatpush1.msra.mxu0 %v1295
        %1303 = vmatprep.subr.mxu0 0.0
        %1304 = vmatpush1.msra.mxu0 0.0
        %1305 = vmatprep.subr.mxu0 0.0
        %1306 = vmatpush1.msra.mxu0 0.0
        %1307 = vmatprep.subr.mxu0 0.0
        %1308 = vmatpush1.msra.mxu0 0.0
        %1309 = vmatprep.subr.mxu0 0.0
        %1310 = vmatpush1.msra.mxu0 0.0
        %1311 = vmatprep.subr.mxu0 0.0
        %1312 = vmatpush1.msra.mxu0 0.0
        %1313 = vmatprep.subr.mxu0 0.0
        %1314 = vmatpush1.msra.mxu0 0.0
        %1315 = vmatprep.subr.mxu0 0.0
        %1316 = vmatpush1.msra.mxu0 0.0
        %1317 = vmatprep.subr.mxu0 0.0
        %1318 = vmatpush1.msra.mxu0 0.0
        %1319 = vmatprep.subr.mxu0 0.0
        %1320 = vmatpush1.msra.mxu0 0.0
        %1321 = vmatprep.subr.mxu0 0.0
        %1322 = vmatpush1.msra.mxu0 0.0
        %1323 = vmatprep.subr.mxu0 0.0
        %1324 = vmatpush1.msra.mxu0 0.0
        %1325 = vmatprep.subr.mxu0 0.0
        %1326 = vmatpush1.msra.mxu0 0.0
        %1327 = vmatprep.subr.mxu0 0.0
        %1328 = vmatpush1.msra.mxu0 0.0
        %1329 = vmatprep.subr.mxu0 0.0
        %1330 = vmatpush1.msra.mxu0 0.0
        %1331 = vmatprep.subr.mxu0 0.0
        %1332 = vmatpush1.msra.mxu0 0.0
        %1333 = vmatprep.subr.mxu0 0.0
        %1334 = vmatpush1.msra.mxu0 0.0
        %1335 = vmatprep.subr.mxu0 0.0
        %1336 = vmatpush1.msra.mxu0 0.0
        %1337 = vmatprep.subr.mxu0 0.0
        %1338 = vmatpush1.msra.mxu0 0.0
        %1339 = vmatprep.subr.mxu0 0.0
        %1340 = vmatpush1.msra.mxu0 0.0
        %1341 = vmatprep.subr.mxu0 0.0
        %1342 = vmatpush1.msra.mxu0 0.0
        %1343 = vmatprep.subr.mxu0 0.0
        %1344 = vmatpush1.msra.mxu0 0.0
        %1345 = vmatprep.subr.mxu0 0.0
        %1346 = vmatpush1.msra.mxu0 0.0
        %1347 = vmatprep.subr.mxu0 0.0
        %1348 = vmatpush1.msra.mxu0 0.0
        %1349 = vmatprep.subr.mxu0 0.0
        %1350 = vmatpush1.msra.mxu0 0.0
        %1351 = vmatprep.subr.mxu0 0.0
        %1352 = vmatpush1.msra.mxu0 0.0
        %1353 = vmatprep.subr.mxu0 0.0
        %1354 = vmatpush1.msra.mxu0 0.0
        %1355 = vmatprep.subr.mxu0 0.0
        %1356 = vmatpush1.msra.mxu0 0.0
        %1357 = vmatprep.subr.mxu0 0.0
        %1358 = vmatpush1.msra.mxu0 0.0
        %1359 = vmatprep.subr.mxu0 0.0
        %1360 = vmatpush1.msra.mxu0 0.0
        %1361 = vmatprep.subr.mxu0 0.0
        %1362 = vmatpush1.msra.mxu0 0.0
        %1363 = vmatprep.subr.mxu0 0.0
        %1364 = vmatpush1.msra.mxu0 0.0
        %1365 = vmatprep.mubr.f32.mxu0 0.0
        %1366 = vmatmul.mubr.f32.gmra.mrb[0].mxu0 %v646
        %v1367 = vpop.f32.mrb[0].mxu0
        %v1368 = vadd.f32 0.0, %v1367
        %v1369 = vpop.f32.mrb[0].mxu0
        %v1370 = vadd.f32 0.0, %v1369
        %1371 = vmatprep.mubr.f32.mxu0 0.0
        %1372 = vmatmul.mubr.f32.gmra.mrb[0].mxu0 %v649
        %v1373 = vpop.f32.mrb[0].mxu0
        %v1374 = vadd.f32 0.0, %v1373
        %v1375 = vpop.f32.mrb[0].mxu0
        %v1376 = vadd.f32 0.0, %v1375
        %1377 = vmatprep.mubr.f32.mxu0 0.0
        %1378 = vmatmul.mubr.f32.gmra.mrb[0].mxu0 %v652
        %v1379 = vpop.f32.mrb[0].mxu0
        %v1380 = vadd.f32 0.0, %v1379
        %v1381 = vpop.f32.mrb[0].mxu0
        %v1382 = vadd.f32 0.0, %v1381
        %1383 = vmatprep.mubr.f32.mxu0 0.0
        %1384 = vmatmul.mubr.f32.gmra.mrb[0].mxu0 %v655
        %v1385 = vpop.f32.mrb[0].mxu0
        %v1386 = vadd.f32 0.0, %v1385
        %v1387 = vpop.f32.mrb[0].mxu0
        %v1388 = vadd.f32 0.0, %v1387
        %1389 = vdwg.mxu0
        %1390 = vmatprep.subr.mxu0 0.0
        %1391 = vmatpush1.msra.mxu0 %v1299
        %1392 = vmatprep.subr.mxu0 0.0
        %1393 = vmatpush1.msra.mxu0 0.0
        %1394 = vmatprep.subr.mxu0 0.0
        %1395 = vmatpush1.msra.mxu0 0.0
        %1396 = vmatprep.subr.mxu0 0.0
        %1397 = vmatpush1.msra.mxu0 0.0
        %1398 = vmatprep.subr.mxu0 0.0
        %1399 = vmatpush1.msra.mxu0 0.0
        %1400 = vmatprep.subr.mxu0 0.0
        %1401 = vmatpush1.msra.mxu0 0.0
        %1402 = vmatprep.subr.mxu0 0.0
        %1403 = vmatpush1.msra.mxu0 0.0
        %1404 = vmatprep.subr.mxu0 0.0
        %1405 = vmatpush1.msra.mxu0 0.0
        %1406 = vmatprep.subr.mxu0 0.0
        %1407 = vmatpush1.msra.mxu0 0.0
        %1408 = vmatprep.subr.mxu0 0.0
        %1409 = vmatpush1.msra.mxu0 0.0
        %1410 = vmatprep.subr.mxu0 0.0
        %1411 = vmatpush1.msra.mxu0 0.0
        %1412 = vmatprep.subr.mxu0 0.0
        %1413 = vmatpush1.msra.mxu0 0.0
        %1414 = vmatprep.subr.mxu0 0.0
        %1415 = vmatpush1.msra.mxu0 0.0
        %1416 = vmatprep.subr.mxu0 0.0
        %1417 = vmatpush1.msra.mxu0 0.0
        %1418 = vmatprep.subr.mxu0 0.0
        %1419 = vmatpush1.msra.mxu0 0.0
        %1420 = vmatprep.subr.mxu0 0.0
        %1421 = vmatpush1.msra.mxu0 0.0
        %1422 = vmatprep.subr.mxu0 0.0
        %1423 = vmatpush1.msra.mxu0 0.0
        %1424 = vmatprep.subr.mxu0 0.0
        %1425 = vmatpush1.msra.mxu0 0.0
        %1426 = vmatprep.subr.mxu0 0.0
        %1427 = vmatpush1.msra.mxu0 0.0
        %1428 = vmatprep.subr.mxu0 0.0
        %1429 = vmatpush1.msra.mxu0 0.0
        %1430 = vmatprep.subr.mxu0 0.0
        %1431 = vmatpush1.msra.mxu0 0.0
        %1432 = vmatprep.subr.mxu0 0.0
        %1433 = vmatpush1.msra.mxu0 0.0
        %1434 = vmatprep.subr.mxu0 0.0
        %1435 = vmatpush1.msra.mxu0 0.0
        %1436 = vmatprep.subr.mxu0 0.0
        %1437 = vmatpush1.msra.mxu0 0.0
        %1438 = vmatprep.subr.mxu0 0.0
        %1439 = vmatpush1.msra.mxu0 0.0
        %1440 = vmatprep.subr.mxu0 0.0
        %1441 = vmatpush1.msra.mxu0 0.0
        %1442 = vmatprep.subr.mxu0 0.0
        %1443 = vmatpush1.msra.mxu0 0.0
        %1444 = vmatprep.subr.mxu0 0.0
        %1445 = vmatpush1.msra.mxu0 0.0
        %1446 = vmatprep.subr.mxu0 0.0
        %1447 = vmatpush1.msra.mxu0 0.0
        %1448 = vmatprep.subr.mxu0 0.0
        %1449 = vmatpush1.msra.mxu0 0.0
        %1450 = vmatprep.subr.mxu0 0.0
        %1451 = vmatpush1.msra.mxu0 0.0
        %1452 = vmatprep.subr.mxu0 0.0
        %1453 = vmatpush1.msra.mxu0 0.0
        %1454 = vmatprep.mubr.f32.mxu0 0.0
        %1455 = vmatmul.mubr.f32.gmra.mrb[0].mxu0 %v646
        %v1456 = vpop.f32.mrb[0].mxu0
        %v1457 = vadd.f32 0.0, %v1456
        %v1458 = vpop.f32.mrb[0].mxu0
        %1459 = vmatprep.mubr.f32.mxu0 0.0
        %1460 = vmatmul.mubr.f32.gmra.mrb[0].mxu0 %v649
        %v1461 = vpop.f32.mrb[0].mxu0
        %v1462 = vadd.f32 0.0, %v1461
        %v1463 = vpop.f32.mrb[0].mxu0
        %1464 = vmatprep.mubr.f32.mxu0 0.0
        %1465 = vmatmul.mubr.f32.gmra.mrb[0].mxu0 %v652
        %v1466 = vpop.f32.mrb[0].mxu0
        %v1467 = vadd.f32 0.0, %v1466
        %v1468 = vpop.f32.mrb[0].mxu0
        %1469 = vmatprep.mubr.f32.mxu0 0.0
        %1470 = vmatmul.mubr.f32.gmra.mrb[0].mxu0 %v655
        %v1471 = vpop.f32.mrb[0].mxu0
        %v1472 = vadd.f32 0.0, %v1471
        %v1473 = vpop.f32.mrb[0].mxu0
        %1474 = vdwg.mxu0
        %v1475 = vadd.f32 %v1176, %v1368
        %v1476 = vadd.f32 %v1178, %v1370
        %v1477 = vadd.f32 %v1265, %v1457
        %v1478 = vadd.f32 %v1182, %v1374
        %v1479 = vadd.f32 %v1184, %v1376
        %v1480 = vadd.f32 %v1270, %v1462
        %v1481 = vadd.f32 %v1188, %v1380
        %v1482 = vadd.f32 %v1190, %v1382
        %v1483 = vadd.f32 %v1275, %v1467
        %v1484 = vadd.f32 %v1194, %v1386
        %v1485 = vadd.f32 %v1196, %v1388
        %v1486 = vadd.f32 %v1280, %v1472
        %v1487 = vadd.f32 %v1475, %v852
        %v1488 = vadd.f32 %v1476, %v852
        %v1489 = vadd.f32 %v1477, %v852
        %v1490 = vadd.f32 %v1478, %v857
        %v1491 = vadd.f32 %v1479, %v857
        %v1492 = vadd.f32 %v1480, %v857
        %v1493 = vadd.f32 %v1481, %v862
        %v1494 = vadd.f32 %v1482, %v862
        %v1495 = vadd.f32 %v1483, %v862
        %v1496 = vadd.f32 %v1484, %v867
        %v1497 = vadd.f32 %v1485, %v867
        %v1498 = vadd.f32 %v1486, %v867
        %s1499 = scalar_lea.vmem %s198, 96 [#allocation3]
        %1500 = vst [vmem:[%s1499] sm:$0xff] %v1487
        %1501 = vst [vmem:[%s1499 + $0x8] sm:$0xff] %v1488
        %1502 = vst [vmem:[%s1499 + $0x10] sm:$0xff] %v1489
        %1503 = vst [vmem:[%s1499 + $0x18] sm:$0xff] %v1490
        %1504 = vst [vmem:[%s1499 + $0x20] sm:$0xff] %v1491
        %1505 = vst [vmem:[%s1499 + $0x28] sm:$0xff] %v1492
        %1506 = vst [vmem:[%s1499 + $0x30] sm:$0xff] %v1493
        %1507 = vst [vmem:[%s1499 + $0x38] sm:$0xff] %v1494
        %1508 = vst [vmem:[%s1499 + $0x40] sm:$0xff] %v1495
        %1509 = vst [vmem:[%s1499 + $0x48] sm:$0xff] %v1496
        %1510 = vst [vmem:[%s1499 + $0x50] sm:$0xff] %v1497
        %1511 = vst [vmem:[%s1499 + $0x58] sm:$0xff] %v1498
        %s1512 = scalar_lea.vmem %s179, 32 [#allocation2]
        %v1513 = vld [vmem:[%s1512] sm:$0xff]
        %v1514 = vld [vmem:[%s1512 + $0x8] sm:$0xff]
        %v1517 = vcombine.high %v1513, %v1513
        %v1518 = vcombine.high %v1514, %v1514
        %1519 = vrot.lane.b32.xlu0 %v1513, 109
        %v1520 = vpop.permute.xlu0 %1519
        %1521 = vrot.lane.b32.xlu0 %v1517, 109
        %v1522 = vpop.permute.xlu0 %1521
        %1523 = vrot.lane.b32.xlu0 %v1514, 109
        %v1524 = vpop.permute.xlu0 %1523
        %1525 = vrot.lane.b32.xlu0 %v1518, 109
        %v1526 = vpop.permute.xlu0 %1525
        %v1527 = vsel %vm231, %v1520, %v1522
        %v1528 = vsel %vm231, %v1522, %v1524
        %v1529 = vsel %vm231, %v1524, %v1526
        %v1530 = vsel %vm248, %v1527, 0
        %v1532 = vsel %vm248, %v1528, 0
        %v1534 = vsel %vm248, %v1529, 0
        %1536 = vmatprep.subr.mxu0 %v1532
        %1537 = vmatpush1.msra.mxu0 %v1530
        %1538 = vmatprep.subr.mxu0 0.0
        %1539 = vmatpush1.msra.mxu0 0.0
        %1540 = vmatprep.subr.mxu0 0.0
        %1541 = vmatpush1.msra.mxu0 0.0
        %1542 = vmatprep.subr.mxu0 0.0
        %1543 = vmatpush1.msra.mxu0 0.0
        %1544 = vmatprep.subr.mxu0 0.0
        %1545 = vmatpush1.msra.mxu0 0.0
        %1546 = vmatprep.subr.mxu0 0.0
        %1547 = vmatpush1.msra.mxu0 0.0
        %1548 = vmatprep.subr.mxu0 0.0
        %1549 = vmatpush1.msra.mxu0 0.0
        %1550 = vmatprep.subr.mxu0 0.0
        %1551 = vmatpush1.msra.mxu0 0.0
        %1552 = vmatprep.subr.mxu0 0.0
        %1553 = vmatpush1.msra.mxu0 0.0
        %1554 = vmatprep.subr.mxu0 0.0
        %1555 = vmatpush1.msra.mxu0 0.0
        %1556 = vmatprep.subr.mxu0 0.0
        %1557 = vmatpush1.msra.mxu0 0.0
        %1558 = vmatprep.subr.mxu0 0.0
        %1559 = vmatpush1.msra.mxu0 0.0
        %1560 = vmatprep.subr.mxu0 0.0
        %1561 = vmatpush1.msra.mxu0 0.0
        %1562 = vmatprep.subr.mxu0 0.0
        %1563 = vmatpush1.msra.mxu0 0.0
        %1564 = vmatprep.subr.mxu0 0.0
        %1565 = vmatpush1.msra.mxu0 0.0
        %1566 = vmatprep.subr.mxu0 0.0
        %1567 = vmatpush1.msra.mxu0 0.0
        %1568 = vmatprep.subr.mxu0 0.0
        %1569 = vmatpush1.msra.mxu0 0.0
        %1570 = vmatprep.subr.mxu0 0.0
        %1571 = vmatpush1.msra.mxu0 0.0
        %1572 = vmatprep.subr.mxu0 0.0
        %1573 = vmatpush1.msra.mxu0 0.0
        %1574 = vmatprep.subr.mxu0 0.0
        %1575 = vmatpush1.msra.mxu0 0.0
        %1576 = vmatprep.subr.mxu0 0.0
        %1577 = vmatpush1.msra.mxu0 0.0
        %1578 = vmatprep.subr.mxu0 0.0
        %1579 = vmatpush1.msra.mxu0 0.0
        %1580 = vmatprep.subr.mxu0 0.0
        %1581 = vmatpush1.msra.mxu0 0.0
        %1582 = vmatprep.subr.mxu0 0.0
        %1583 = vmatpush1.msra.mxu0 0.0
        %1584 = vmatprep.subr.mxu0 0.0
        %1585 = vmatpush1.msra.mxu0 0.0
        %1586 = vmatprep.subr.mxu0 0.0
        %1587 = vmatpush1.msra.mxu0 0.0
        %1588 = vmatprep.subr.mxu0 0.0
        %1589 = vmatpush1.msra.mxu0 0.0
        %1590 = vmatprep.subr.mxu0 0.0
        %1591 = vmatpush1.msra.mxu0 0.0
        %1592 = vmatprep.subr.mxu0 0.0
        %1593 = vmatpush1.msra.mxu0 0.0
        %1594 = vmatprep.subr.mxu0 0.0
        %1595 = vmatpush1.msra.mxu0 0.0
        %1596 = vmatprep.subr.mxu0 0.0
        %1597 = vmatpush1.msra.mxu0 0.0
        %1598 = vmatprep.subr.mxu0 0.0
        %1599 = vmatpush1.msra.mxu0 0.0
        %1600 = vmatprep.mubr.f32.mxu0 0.0
        %1601 = vmatmul.mubr.f32.gmra.mrb[0].mxu0 %v237
        %v1602 = vpop.f32.mrb[0].mxu0
        %v1603 = vadd.f32 0.0, %v1602
        %v1604 = vpop.f32.mrb[0].mxu0
        %v1605 = vadd.f32 0.0, %v1604
        %1606 = vmatprep.mubr.f32.mxu0 0.0
        %1607 = vmatmul.mubr.f32.gmra.mrb[0].mxu0 %v240
        %v1608 = vpop.f32.mrb[0].mxu0
        %v1609 = vadd.f32 0.0, %v1608
        %v1610 = vpop.f32.mrb[0].mxu0
        %v1611 = vadd.f32 0.0, %v1610
        %1612 = vmatprep.mubr.f32.mxu0 0.0
        %1613 = vmatmul.mubr.f32.gmra.mrb[0].mxu0 %v243
        %v1614 = vpop.f32.mrb[0].mxu0
        %v1615 = vadd.f32 0.0, %v1614
        %v1616 = vpop.f32.mrb[0].mxu0
        %v1617 = vadd.f32 0.0, %v1616
        %1618 = vmatprep.mubr.f32.mxu0 0.0
        %1619 = vmatmul.mubr.f32.gmra.mrb[0].mxu0 %v246
        %v1620 = vpop.f32.mrb[0].mxu0
        %v1621 = vadd.f32 0.0, %v1620
        %v1622 = vpop.f32.mrb[0].mxu0
        %v1623 = vadd.f32 0.0, %v1622
        %1624 = vdwg.mxu0
        %1625 = vmatprep.subr.mxu0 0.0
        %1626 = vmatpush1.msra.mxu0 %v1534
        %1627 = vmatprep.subr.mxu0 0.0
        %1628 = vmatpush1.msra.mxu0 0.0
        %1629 = vmatprep.subr.mxu0 0.0
        %1630 = vmatpush1.msra.mxu0 0.0
        %1631 = vmatprep.subr.mxu0 0.0
        %1632 = vmatpush1.msra.mxu0 0.0
        %1633 = vmatprep.subr.mxu0 0.0
        %1634 = vmatpush1.msra.mxu0 0.0
        %1635 = vmatprep.subr.mxu0 0.0
        %1636 = vmatpush1.msra.mxu0 0.0
        %1637 = vmatprep.subr.mxu0 0.0
        %1638 = vmatpush1.msra.mxu0 0.0
        %1639 = vmatprep.subr.mxu0 0.0
        %1640 = vmatpush1.msra.mxu0 0.0
        %1641 = vmatprep.subr.mxu0 0.0
        %1642 = vmatpush1.msra.mxu0 0.0
        %1643 = vmatprep.subr.mxu0 0.0
        %1644 = vmatpush1.msra.mxu0 0.0
        %1645 = vmatprep.subr.mxu0 0.0
        %1646 = vmatpush1.msra.mxu0 0.0
        %1647 = vmatprep.subr.mxu0 0.0
        %1648 = vmatpush1.msra.mxu0 0.0
        %1649 = vmatprep.subr.mxu0 0.0
        %1650 = vmatpush1.msra.mxu0 0.0
        %1651 = vmatprep.subr.mxu0 0.0
        %1652 = vmatpush1.msra.mxu0 0.0
        %1653 = vmatprep.subr.mxu0 0.0
        %1654 = vmatpush1.msra.mxu0 0.0
        %1655 = vmatprep.subr.mxu0 0.0
        %1656 = vmatpush1.msra.mxu0 0.0
        %1657 = vmatprep.subr.mxu0 0.0
        %1658 = vmatpush1.msra.mxu0 0.0
        %1659 = vmatprep.subr.mxu0 0.0
        %1660 = vmatpush1.msra.mxu0 0.0
        %1661 = vmatprep.subr.mxu0 0.0
        %1662 = vmatpush1.msra.mxu0 0.0
        %1663 = vmatprep.subr.mxu0 0.0
        %1664 = vmatpush1.msra.mxu0 0.0
        %1665 = vmatprep.subr.mxu0 0.0
        %1666 = vmatpush1.msra.mxu0 0.0
        %1667 = vmatprep.subr.mxu0 0.0
        %1668 = vmatpush1.msra.mxu0 0.0
        %1669 = vmatprep.subr.mxu0 0.0
        %1670 = vmatpush1.msra.mxu0 0.0
        %1671 = vmatprep.subr.mxu0 0.0
        %1672 = vmatpush1.msra.mxu0 0.0
        %1673 = vmatprep.subr.mxu0 0.0
        %1674 = vmatpush1.msra.mxu0 0.0
        %1675 = vmatprep.subr.mxu0 0.0
        %1676 = vmatpush1.msra.mxu0 0.0
        %1677 = vmatprep.subr.mxu0 0.0
        %1678 = vmatpush1.msra.mxu0 0.0
        %1679 = vmatprep.subr.mxu0 0.0
        %1680 = vmatpush1.msra.mxu0 0.0
        %1681 = vmatprep.subr.mxu0 0.0
        %1682 = vmatpush1.msra.mxu0 0.0
        %1683 = vmatprep.subr.mxu0 0.0
        %1684 = vmatpush1.msra.mxu0 0.0
        %1685 = vmatprep.subr.mxu0 0.0
        %1686 = vmatpush1.msra.mxu0 0.0
        %1687 = vmatprep.subr.mxu0 0.0
        %1688 = vmatpush1.msra.mxu0 0.0
        %1689 = vmatprep.mubr.f32.mxu0 0.0
        %1690 = vmatmul.mubr.f32.gmra.mrb[0].mxu0 %v237
        %v1691 = vpop.f32.mrb[0].mxu0
        %v1692 = vadd.f32 0.0, %v1691
        %v1693 = vpop.f32.mrb[0].mxu0
        %1694 = vmatprep.mubr.f32.mxu0 0.0
        %1695 = vmatmul.mubr.f32.gmra.mrb[0].mxu0 %v240
        %v1696 = vpop.f32.mrb[0].mxu0
        %v1697 = vadd.f32 0.0, %v1696
        %v1698 = vpop.f32.mrb[0].mxu0
        %1699 = vmatprep.mubr.f32.mxu0 0.0
        %1700 = vmatmul.mubr.f32.gmra.mrb[0].mxu0 %v243
        %v1701 = vpop.f32.mrb[0].mxu0
        %v1702 = vadd.f32 0.0, %v1701
        %v1703 = vpop.f32.mrb[0].mxu0
        %1704 = vmatprep.mubr.f32.mxu0 0.0
        %1705 = vmatmul.mubr.f32.gmra.mrb[0].mxu0 %v246
        %v1706 = vpop.f32.mrb[0].mxu0
        %v1707 = vadd.f32 0.0, %v1706
        %v1708 = vpop.f32.mrb[0].mxu0
        %1709 = vdwg.mxu0
        %v1710 = vsel %vm248, %v1513, 0
        %v1712 = vsel %vm248, %v1517, 0
        %v1714 = vsel %vm248, %v1514, 0
        %1716 = vmatprep.subr.mxu0 %v1712
        %1717 = vmatpush1.msra.mxu0 %v1710
        %1718 = vmatprep.subr.mxu0 0.0
        %1719 = vmatpush1.msra.mxu0 0.0
        %1720 = vmatprep.subr.mxu0 0.0
        %1721 = vmatpush1.msra.mxu0 0.0
        %1722 = vmatprep.subr.mxu0 0.0
        %1723 = vmatpush1.msra.mxu0 0.0
        %1724 = vmatprep.subr.mxu0 0.0
        %1725 = vmatpush1.msra.mxu0 0.0
        %1726 = vmatprep.subr.mxu0 0.0
        %1727 = vmatpush1.msra.mxu0 0.0
        %1728 = vmatprep.subr.mxu0 0.0
        %1729 = vmatpush1.msra.mxu0 0.0
        %1730 = vmatprep.subr.mxu0 0.0
        %1731 = vmatpush1.msra.mxu0 0.0
        %1732 = vmatprep.subr.mxu0 0.0
        %1733 = vmatpush1.msra.mxu0 0.0
        %1734 = vmatprep.subr.mxu0 0.0
        %1735 = vmatpush1.msra.mxu0 0.0
        %1736 = vmatprep.subr.mxu0 0.0
        %1737 = vmatpush1.msra.mxu0 0.0
        %1738 = vmatprep.subr.mxu0 0.0
        %1739 = vmatpush1.msra.mxu0 0.0
        %1740 = vmatprep.subr.mxu0 0.0
        %1741 = vmatpush1.msra.mxu0 0.0
        %1742 = vmatprep.subr.mxu0 0.0
        %1743 = vmatpush1.msra.mxu0 0.0
        %1744 = vmatprep.subr.mxu0 0.0
        %1745 = vmatpush1.msra.mxu0 0.0
        %1746 = vmatprep.subr.mxu0 0.0
        %1747 = vmatpush1.msra.mxu0 0.0
        %1748 = vmatprep.subr.mxu0 0.0
        %1749 = vmatpush1.msra.mxu0 0.0
        %1750 = vmatprep.subr.mxu0 0.0
        %1751 = vmatpush1.msra.mxu0 0.0
        %1752 = vmatprep.subr.mxu0 0.0
        %1753 = vmatpush1.msra.mxu0 0.0
        %1754 = vmatprep.subr.mxu0 0.0
        %1755 = vmatpush1.msra.mxu0 0.0
        %1756 = vmatprep.subr.mxu0 0.0
        %1757 = vmatpush1.msra.mxu0 0.0
        %1758 = vmatprep.subr.mxu0 0.0
        %1759 = vmatpush1.msra.mxu0 0.0
        %1760 = vmatprep.subr.mxu0 0.0
        %1761 = vmatpush1.msra.mxu0 0.0
        %1762 = vmatprep.subr.mxu0 0.0
        %1763 = vmatpush1.msra.mxu0 0.0
        %1764 = vmatprep.subr.mxu0 0.0
        %1765 = vmatpush1.msra.mxu0 0.0
        %1766 = vmatprep.subr.mxu0 0.0
        %1767 = vmatpush1.msra.mxu0 0.0
        %1768 = vmatprep.subr.mxu0 0.0
        %1769 = vmatpush1.msra.mxu0 0.0
        %1770 = vmatprep.subr.mxu0 0.0
        %1771 = vmatpush1.msra.mxu0 0.0
        %1772 = vmatprep.subr.mxu0 0.0
        %1773 = vmatpush1.msra.mxu0 0.0
        %1774 = vmatprep.subr.mxu0 0.0
        %1775 = vmatpush1.msra.mxu0 0.0
        %1776 = vmatprep.subr.mxu0 0.0
        %1777 = vmatpush1.msra.mxu0 0.0
        %1778 = vmatprep.subr.mxu0 0.0
        %1779 = vmatpush1.msra.mxu0 0.0
        %1780 = vmatprep.mubr.f32.mxu0 0.0
        %1781 = vmatmul.mubr.f32.gmra.mrb[0].mxu0 %v442
        %v1782 = vpop.f32.mrb[0].mxu0
        %v1783 = vadd.f32 %v1603, %v1782
        %v1784 = vpop.f32.mrb[0].mxu0
        %v1785 = vadd.f32 %v1605, %v1784
        %1786 = vmatprep.mubr.f32.mxu0 0.0
        %1787 = vmatmul.mubr.f32.gmra.mrb[0].mxu0 %v445
        %v1788 = vpop.f32.mrb[0].mxu0
        %v1789 = vadd.f32 %v1609, %v1788
        %v1790 = vpop.f32.mrb[0].mxu0
        %v1791 = vadd.f32 %v1611, %v1790
        %1792 = vmatprep.mubr.f32.mxu0 0.0
        %1793 = vmatmul.mubr.f32.gmra.mrb[0].mxu0 %v448
        %v1794 = vpop.f32.mrb[0].mxu0
        %v1795 = vadd.f32 %v1615, %v1794
        %v1796 = vpop.f32.mrb[0].mxu0
        %v1797 = vadd.f32 %v1617, %v1796
        %1798 = vmatprep.mubr.f32.mxu0 0.0
        %1799 = vmatmul.mubr.f32.gmra.mrb[0].mxu0 %v451
        %v1800 = vpop.f32.mrb[0].mxu0
        %v1801 = vadd.f32 %v1621, %v1800
        %v1802 = vpop.f32.mrb[0].mxu0
        %v1803 = vadd.f32 %v1623, %v1802
        %1804 = vdwg.mxu0
        %1805 = vmatprep.subr.mxu0 0.0
        %1806 = vmatpush1.msra.mxu0 %v1714
        %1807 = vmatprep.subr.mxu0 0.0
        %1808 = vmatpush1.msra.mxu0 0.0
        %1809 = vmatprep.subr.mxu0 0.0
        %1810 = vmatpush1.msra.mxu0 0.0
        %1811 = vmatprep.subr.mxu0 0.0
        %1812 = vmatpush1.msra.mxu0 0.0
        %1813 = vmatprep.subr.mxu0 0.0
        %1814 = vmatpush1.msra.mxu0 0.0
        %1815 = vmatprep.subr.mxu0 0.0
        %1816 = vmatpush1.msra.mxu0 0.0
        %1817 = vmatprep.subr.mxu0 0.0
        %1818 = vmatpush1.msra.mxu0 0.0
        %1819 = vmatprep.subr.mxu0 0.0
        %1820 = vmatpush1.msra.mxu0 0.0
        %1821 = vmatprep.subr.mxu0 0.0
        %1822 = vmatpush1.msra.mxu0 0.0
        %1823 = vmatprep.subr.mxu0 0.0
        %1824 = vmatpush1.msra.mxu0 0.0
        %1825 = vmatprep.subr.mxu0 0.0
        %1826 = vmatpush1.msra.mxu0 0.0
        %1827 = vmatprep.subr.mxu0 0.0
        %1828 = vmatpush1.msra.mxu0 0.0
        %1829 = vmatprep.subr.mxu0 0.0
        %1830 = vmatpush1.msra.mxu0 0.0
        %1831 = vmatprep.subr.mxu0 0.0
        %1832 = vmatpush1.msra.mxu0 0.0
        %1833 = vmatprep.subr.mxu0 0.0
        %1834 = vmatpush1.msra.mxu0 0.0
        %1835 = vmatprep.subr.mxu0 0.0
        %1836 = vmatpush1.msra.mxu0 0.0
        %1837 = vmatprep.subr.mxu0 0.0
        %1838 = vmatpush1.msra.mxu0 0.0
        %1839 = vmatprep.subr.mxu0 0.0
        %1840 = vmatpush1.msra.mxu0 0.0
        %1841 = vmatprep.subr.mxu0 0.0
        %1842 = vmatpush1.msra.mxu0 0.0
        %1843 = vmatprep.subr.mxu0 0.0
        %1844 = vmatpush1.msra.mxu0 0.0
        %1845 = vmatprep.subr.mxu0 0.0
        %1846 = vmatpush1.msra.mxu0 0.0
        %1847 = vmatprep.subr.mxu0 0.0
        %1848 = vmatpush1.msra.mxu0 0.0
        %1849 = vmatprep.subr.mxu0 0.0
        %1850 = vmatpush1.msra.mxu0 0.0
        %1851 = vmatprep.subr.mxu0 0.0
        %1852 = vmatpush1.msra.mxu0 0.0
        %1853 = vmatprep.subr.mxu0 0.0
        %1854 = vmatpush1.msra.mxu0 0.0
        %1855 = vmatprep.subr.mxu0 0.0
        %1856 = vmatpush1.msra.mxu0 0.0
        %1857 = vmatprep.subr.mxu0 0.0
        %1858 = vmatpush1.msra.mxu0 0.0
        %1859 = vmatprep.subr.mxu0 0.0
        %1860 = vmatpush1.msra.mxu0 0.0
        %1861 = vmatprep.subr.mxu0 0.0
        %1862 = vmatpush1.msra.mxu0 0.0
        %1863 = vmatprep.subr.mxu0 0.0
        %1864 = vmatpush1.msra.mxu0 0.0
        %1865 = vmatprep.subr.mxu0 0.0
        %1866 = vmatpush1.msra.mxu0 0.0
        %1867 = vmatprep.subr.mxu0 0.0
        %1868 = vmatpush1.msra.mxu0 0.0
        %1869 = vmatprep.mubr.f32.mxu0 0.0
        %1870 = vmatmul.mubr.f32.gmra.mrb[0].mxu0 %v442
        %v1871 = vpop.f32.mrb[0].mxu0
        %v1872 = vadd.f32 %v1692, %v1871
        %v1873 = vpop.f32.mrb[0].mxu0
        %1874 = vmatprep.mubr.f32.mxu0 0.0
        %1875 = vmatmul.mubr.f32.gmra.mrb[0].mxu0 %v445
        %v1876 = vpop.f32.mrb[0].mxu0
        %v1877 = vadd.f32 %v1697, %v1876
        %v1878 = vpop.f32.mrb[0].mxu0
        %1879 = vmatprep.mubr.f32.mxu0 0.0
        %1880 = vmatmul.mubr.f32.gmra.mrb[0].mxu0 %v448
        %v1881 = vpop.f32.mrb[0].mxu0
        %v1882 = vadd.f32 %v1702, %v1881
        %v1883 = vpop.f32.mrb[0].mxu0
        %1884 = vmatprep.mubr.f32.mxu0 0.0
        %1885 = vmatmul.mubr.f32.gmra.mrb[0].mxu0 %v451
        %v1886 = vpop.f32.mrb[0].mxu0
        %v1887 = vadd.f32 %v1707, %v1886
        %v1888 = vpop.f32.mrb[0].mxu0
        %1889 = vdwg.mxu0
        %1890 = vrot.lane.b32.xlu0 %v1513, 90
        %v1891 = vpop.permute.xlu0 %1890
        %1892 = vrot.lane.b32.xlu0 %v1517, 90
        %v1893 = vpop.permute.xlu0 %1892
        %1894 = vrot.lane.b32.xlu0 %v1514, 90
        %v1895 = vpop.permute.xlu0 %1894
        %1896 = vrot.lane.b32.xlu0 %v1518, 90
        %v1897 = vpop.permute.xlu0 %1896
        %vm1898 = vcmask 736256
        %v1899 = vsel %vm1898, %v1891, %v1893
        %v1900 = vsel %vm1898, %v1893, %v1895
        %v1901 = vsel %vm1898, %v1895, %v1897
        %v1902 = vsel %vm248, %v1899, 0
        %v1904 = vsel %vm248, %v1900, 0
        %v1906 = vsel %vm248, %v1901, 0
        %1908 = vmatprep.subr.mxu0 %v1904
        %1909 = vmatpush1.msra.mxu0 %v1902
        %1910 = vmatprep.subr.mxu0 0.0
        %1911 = vmatpush1.msra.mxu0 0.0
        %1912 = vmatprep.subr.mxu0 0.0
        %1913 = vmatpush1.msra.mxu0 0.0
        %1914 = vmatprep.subr.mxu0 0.0
        %1915 = vmatpush1.msra.mxu0 0.0
        %1916 = vmatprep.subr.mxu0 0.0
        %1917 = vmatpush1.msra.mxu0 0.0
        %1918 = vmatprep.subr.mxu0 0.0
        %1919 = vmatpush1.msra.mxu0 0.0
        %1920 = vmatprep.subr.mxu0 0.0
        %1921 = vmatpush1.msra.mxu0 0.0
        %1922 = vmatprep.subr.mxu0 0.0
        %1923 = vmatpush1.msra.mxu0 0.0
        %1924 = vmatprep.subr.mxu0 0.0
        %1925 = vmatpush1.msra.mxu0 0.0
        %1926 = vmatprep.subr.mxu0 0.0
        %1927 = vmatpush1.msra.mxu0 0.0
        %1928 = vmatprep.subr.mxu0 0.0
        %1929 = vmatpush1.msra.mxu0 0.0
        %1930 = vmatprep.subr.mxu0 0.0
        %1931 = vmatpush1.msra.mxu0 0.0
        %1932 = vmatprep.subr.mxu0 0.0
        %1933 = vmatpush1.msra.mxu0 0.0
        %1934 = vmatprep.subr.mxu0 0.0
        %1935 = vmatpush1.msra.mxu0 0.0
        %1936 = vmatprep.subr.mxu0 0.0
        %1937 = vmatpush1.msra.mxu0 0.0
        %1938 = vmatprep.subr.mxu0 0.0
        %1939 = vmatpush1.msra.mxu0 0.0
        %1940 = vmatprep.subr.mxu0 0.0
        %1941 = vmatpush1.msra.mxu0 0.0
        %1942 = vmatprep.subr.mxu0 0.0
        %1943 = vmatpush1.msra.mxu0 0.0
        %1944 = vmatprep.subr.mxu0 0.0
        %1945 = vmatpush1.msra.mxu0 0.0
        %1946 = vmatprep.subr.mxu0 0.0
        %1947 = vmatpush1.msra.mxu0 0.0
        %1948 = vmatprep.subr.mxu0 0.0
        %1949 = vmatpush1.msra.mxu0 0.0
        %1950 = vmatprep.subr.mxu0 0.0
        %1951 = vmatpush1.msra.mxu0 0.0
        %1952 = vmatprep.subr.mxu0 0.0
        %1953 = vmatpush1.msra.mxu0 0.0
        %1954 = vmatprep.subr.mxu0 0.0
        %1955 = vmatpush1.msra.mxu0 0.0
        %1956 = vmatprep.subr.mxu0 0.0
        %1957 = vmatpush1.msra.mxu0 0.0
        %1958 = vmatprep.subr.mxu0 0.0
        %1959 = vmatpush1.msra.mxu0 0.0
        %1960 = vmatprep.subr.mxu0 0.0
        %1961 = vmatpush1.msra.mxu0 0.0
        %1962 = vmatprep.subr.mxu0 0.0
        %1963 = vmatpush1.msra.mxu0 0.0
        %1964 = vmatprep.subr.mxu0 0.0
        %1965 = vmatpush1.msra.mxu0 0.0
        %1966 = vmatprep.subr.mxu0 0.0
        %1967 = vmatpush1.msra.mxu0 0.0
        %1968 = vmatprep.subr.mxu0 0.0
        %1969 = vmatpush1.msra.mxu0 0.0
        %1970 = vmatprep.subr.mxu0 0.0
        %1971 = vmatpush1.msra.mxu0 0.0
        %1972 = vmatprep.mubr.f32.mxu0 0.0
        %1973 = vmatmul.mubr.f32.gmra.mrb[0].mxu0 %v646
        %v1974 = vpop.f32.mrb[0].mxu0
        %v1975 = vadd.f32 0.0, %v1974
        %v1976 = vpop.f32.mrb[0].mxu0
        %v1977 = vadd.f32 0.0, %v1976
        %1978 = vmatprep.mubr.f32.mxu0 0.0
        %1979 = vmatmul.mubr.f32.gmra.mrb[0].mxu0 %v649
        %v1980 = vpop.f32.mrb[0].mxu0
        %v1981 = vadd.f32 0.0, %v1980
        %v1982 = vpop.f32.mrb[0].mxu0
        %v1983 = vadd.f32 0.0, %v1982
        %1984 = vmatprep.mubr.f32.mxu0 0.0
        %1985 = vmatmul.mubr.f32.gmra.mrb[0].mxu0 %v652
        %v1986 = vpop.f32.mrb[0].mxu0
        %v1987 = vadd.f32 0.0, %v1986
        %v1988 = vpop.f32.mrb[0].mxu0
        %v1989 = vadd.f32 0.0, %v1988
        %1990 = vmatprep.mubr.f32.mxu0 0.0
        %1991 = vmatmul.mubr.f32.gmra.mrb[0].mxu0 %v655
        %v1992 = vpop.f32.mrb[0].mxu0
        %v1993 = vadd.f32 0.0, %v1992
        %v1994 = vpop.f32.mrb[0].mxu0
        %v1995 = vadd.f32 0.0, %v1994
        %1996 = vdwg.mxu0
        %1997 = vmatprep.subr.mxu0 0.0
        %1998 = vmatpush1.msra.mxu0 %v1906
        %1999 = vmatprep.subr.mxu0 0.0
        %2000 = vmatpush1.msra.mxu0 0.0
        %2001 = vmatprep.subr.mxu0 0.0
        %2002 = vmatpush1.msra.mxu0 0.0
        %2003 = vmatprep.subr.mxu0 0.0
        %2004 = vmatpush1.msra.mxu0 0.0
        %2005 = vmatprep.subr.mxu0 0.0
        %2006 = vmatpush1.msra.mxu0 0.0
        %2007 = vmatprep.subr.mxu0 0.0
        %2008 = vmatpush1.msra.mxu0 0.0
        %2009 = vmatprep.subr.mxu0 0.0
        %2010 = vmatpush1.msra.mxu0 0.0
        %2011 = vmatprep.subr.mxu0 0.0
        %2012 = vmatpush1.msra.mxu0 0.0
        %2013 = vmatprep.subr.mxu0 0.0
        %2014 = vmatpush1.msra.mxu0 0.0
        %2015 = vmatprep.subr.mxu0 0.0
        %2016 = vmatpush1.msra.mxu0 0.0
        %2017 = vmatprep.subr.mxu0 0.0
        %2018 = vmatpush1.msra.mxu0 0.0
        %2019 = vmatprep.subr.mxu0 0.0
        %2020 = vmatpush1.msra.mxu0 0.0
        %2021 = vmatprep.subr.mxu0 0.0
        %2022 = vmatpush1.msra.mxu0 0.0
        %2023 = vmatprep.subr.mxu0 0.0
        %2024 = vmatpush1.msra.mxu0 0.0
        %2025 = vmatprep.subr.mxu0 0.0
        %2026 = vmatpush1.msra.mxu0 0.0
        %2027 = vmatprep.subr.mxu0 0.0
        %2028 = vmatpush1.msra.mxu0 0.0
        %2029 = vmatprep.subr.mxu0 0.0
        %2030 = vmatpush1.msra.mxu0 0.0
        %2031 = vmatprep.subr.mxu0 0.0
        %2032 = vmatpush1.msra.mxu0 0.0
        %2033 = vmatprep.subr.mxu0 0.0
        %2034 = vmatpush1.msra.mxu0 0.0
        %2035 = vmatprep.subr.mxu0 0.0
        %2036 = vmatpush1.msra.mxu0 0.0
        %2037 = vmatprep.subr.mxu0 0.0
        %2038 = vmatpush1.msra.mxu0 0.0
        %2039 = vmatprep.subr.mxu0 0.0
        %2040 = vmatpush1.msra.mxu0 0.0
        %2041 = vmatprep.subr.mxu0 0.0
        %2042 = vmatpush1.msra.mxu0 0.0
        %2043 = vmatprep.subr.mxu0 0.0
        %2044 = vmatpush1.msra.mxu0 0.0
        %2045 = vmatprep.subr.mxu0 0.0
        %2046 = vmatpush1.msra.mxu0 0.0
        %2047 = vmatprep.subr.mxu0 0.0
        %2048 = vmatpush1.msra.mxu0 0.0
        %2049 = vmatprep.subr.mxu0 0.0
        %2050 = vmatpush1.msra.mxu0 0.0
        %2051 = vmatprep.subr.mxu0 0.0
        %2052 = vmatpush1.msra.mxu0 0.0
        %2053 = vmatprep.subr.mxu0 0.0
        %2054 = vmatpush1.msra.mxu0 0.0
        %2055 = vmatprep.subr.mxu0 0.0
        %2056 = vmatpush1.msra.mxu0 0.0
        %2057 = vmatprep.subr.mxu0 0.0
        %2058 = vmatpush1.msra.mxu0 0.0
        %2059 = vmatprep.subr.mxu0 0.0
        %2060 = vmatpush1.msra.mxu0 0.0
        %2061 = vmatprep.mubr.f32.mxu0 0.0
        %2062 = vmatmul.mubr.f32.gmra.mrb[0].mxu0 %v646
        %v2063 = vpop.f32.mrb[0].mxu0
        %v2064 = vadd.f32 0.0, %v2063
        %v2065 = vpop.f32.mrb[0].mxu0
        %2066 = vmatprep.mubr.f32.mxu0 0.0
        %2067 = vmatmul.mubr.f32.gmra.mrb[0].mxu0 %v649
        %v2068 = vpop.f32.mrb[0].mxu0
        %v2069 = vadd.f32 0.0, %v2068
        %v2070 = vpop.f32.mrb[0].mxu0
        %2071 = vmatprep.mubr.f32.mxu0 0.0
        %2072 = vmatmul.mubr.f32.gmra.mrb[0].mxu0 %v652
        %v2073 = vpop.f32.mrb[0].mxu0
        %v2074 = vadd.f32 0.0, %v2073
        %v2075 = vpop.f32.mrb[0].mxu0
        %2076 = vmatprep.mubr.f32.mxu0 0.0
        %2077 = vmatmul.mubr.f32.gmra.mrb[0].mxu0 %v655
        %v2078 = vpop.f32.mrb[0].mxu0
        %v2079 = vadd.f32 0.0, %v2078
        %v2080 = vpop.f32.mrb[0].mxu0
        %2081 = vdwg.mxu0
        %v2082 = vadd.f32 %v1783, %v1975
        %v2083 = vadd.f32 %v1785, %v1977
        %v2084 = vadd.f32 %v1872, %v2064
        %v2085 = vadd.f32 %v1789, %v1981
        %v2086 = vadd.f32 %v1791, %v1983
        %v2087 = vadd.f32 %v1877, %v2069
        %v2088 = vadd.f32 %v1795, %v1987
        %v2089 = vadd.f32 %v1797, %v1989
        %v2090 = vadd.f32 %v1882, %v2074
        %v2091 = vadd.f32 %v1801, %v1993
        %v2092 = vadd.f32 %v1803, %v1995
        %v2093 = vadd.f32 %v1887, %v2079
        %v2094 = vadd.f32 %v2082, %v852
        %v2095 = vadd.f32 %v2083, %v852
        %v2096 = vadd.f32 %v2084, %v852
        %v2097 = vadd.f32 %v2085, %v857
        %v2098 = vadd.f32 %v2086, %v857
        %v2099 = vadd.f32 %v2087, %v857
        %v2100 = vadd.f32 %v2088, %v862
        %v2101 = vadd.f32 %v2089, %v862
        %v2102 = vadd.f32 %v2090, %v862
        %v2103 = vadd.f32 %v2091, %v867
        %v2104 = vadd.f32 %v2092, %v867
        %v2105 = vadd.f32 %v2093, %v867
        %s2106 = scalar_lea.vmem %s198, 192 [#allocation3]
        %2107 = vst [vmem:[%s2106] sm:$0xff] %v2094
        %2108 = vst [vmem:[%s2106 + $0x8] sm:$0xff] %v2095
        %2109 = vst [vmem:[%s2106 + $0x10] sm:$0xff] %v2096
        %2110 = vst [vmem:[%s2106 + $0x18] sm:$0xff] %v2097
        %2111 = vst [vmem:[%s2106 + $0x20] sm:$0xff] %v2098
        %2112 = vst [vmem:[%s2106 + $0x28] sm:$0xff] %v2099
        %2113 = vst [vmem:[%s2106 + $0x30] sm:$0xff] %v2100
        %2114 = vst [vmem:[%s2106 + $0x38] sm:$0xff] %v2101
        %2115 = vst [vmem:[%s2106 + $0x40] sm:$0xff] %v2102
        %2116 = vst [vmem:[%s2106 + $0x48] sm:$0xff] %v2103
        %2117 = vst [vmem:[%s2106 + $0x50] sm:$0xff] %v2104
        %2118 = vst [vmem:[%s2106 + $0x58] sm:$0xff] %v2105
        %s2119 = scalar_lea.vmem %s179, 48 [#allocation2]
        %v2120 = vld [vmem:[%s2119] sm:$0xff]
        %v2121 = vld [vmem:[%s2119 + $0x8] sm:$0xff]
        %v2124 = vcombine.high %v2120, %v2120
        %v2125 = vcombine.high %v2121, %v2121
        %2126 = vrot.lane.b32.xlu0 %v2120, 109
        %v2127 = vpop.permute.xlu0 %2126
        %2128 = vrot.lane.b32.xlu0 %v2124, 109
        %v2129 = vpop.permute.xlu0 %2128
        %2130 = vrot.lane.b32.xlu0 %v2121, 109
        %v2131 = vpop.permute.xlu0 %2130
        %2132 = vrot.lane.b32.xlu0 %v2125, 109
        %v2133 = vpop.permute.xlu0 %2132
        %v2134 = vsel %vm231, %v2127, %v2129
        %v2135 = vsel %vm231, %v2129, %v2131
        %v2136 = vsel %vm231, %v2131, %v2133
        %v2137 = vsel %vm248, %v2134, 0
        %v2139 = vsel %vm248, %v2135, 0
        %v2141 = vsel %vm248, %v2136, 0
        %2143 = vmatprep.subr.mxu0 %v2139
        %2144 = vmatpush1.msra.mxu0 %v2137
        %2145 = vmatprep.subr.mxu0 0.0
        %2146 = vmatpush1.msra.mxu0 0.0
        %2147 = vmatprep.subr.mxu0 0.0
        %2148 = vmatpush1.msra.mxu0 0.0
        %2149 = vmatprep.subr.mxu0 0.0
        %2150 = vmatpush1.msra.mxu0 0.0
        %2151 = vmatprep.subr.mxu0 0.0
        %2152 = vmatpush1.msra.mxu0 0.0
        %2153 = vmatprep.subr.mxu0 0.0
        %2154 = vmatpush1.msra.mxu0 0.0
        %2155 = vmatprep.subr.mxu0 0.0
        %2156 = vmatpush1.msra.mxu0 0.0
        %2157 = vmatprep.subr.mxu0 0.0
        %2158 = vmatpush1.msra.mxu0 0.0
        %2159 = vmatprep.subr.mxu0 0.0
        %2160 = vmatpush1.msra.mxu0 0.0
        %2161 = vmatprep.subr.mxu0 0.0
        %2162 = vmatpush1.msra.mxu0 0.0
        %2163 = vmatprep.subr.mxu0 0.0
        %2164 = vmatpush1.msra.mxu0 0.0
        %2165 = vmatprep.subr.mxu0 0.0
        %2166 = vmatpush1.msra.mxu0 0.0
        %2167 = vmatprep.subr.mxu0 0.0
        %2168 = vmatpush1.msra.mxu0 0.0
        %2169 = vmatprep.subr.mxu0 0.0
        %2170 = vmatpush1.msra.mxu0 0.0
        %2171 = vmatprep.subr.mxu0 0.0
        %2172 = vmatpush1.msra.mxu0 0.0
        %2173 = vmatprep.subr.mxu0 0.0
        %2174 = vmatpush1.msra.mxu0 0.0
        %2175 = vmatprep.subr.mxu0 0.0
        %2176 = vmatpush1.msra.mxu0 0.0
        %2177 = vmatprep.subr.mxu0 0.0
        %2178 = vmatpush1.msra.mxu0 0.0
        %2179 = vmatprep.subr.mxu0 0.0
        %2180 = vmatpush1.msra.mxu0 0.0
        %2181 = vmatprep.subr.mxu0 0.0
        %2182 = vmatpush1.msra.mxu0 0.0
        %2183 = vmatprep.subr.mxu0 0.0
        %2184 = vmatpush1.msra.mxu0 0.0
        %2185 = vmatprep.subr.mxu0 0.0
        %2186 = vmatpush1.msra.mxu0 0.0
        %2187 = vmatprep.subr.mxu0 0.0
        %2188 = vmatpush1.msra.mxu0 0.0
        %2189 = vmatprep.subr.mxu0 0.0
        %2190 = vmatpush1.msra.mxu0 0.0
        %2191 = vmatprep.subr.mxu0 0.0
        %2192 = vmatpush1.msra.mxu0 0.0
        %2193 = vmatprep.subr.mxu0 0.0
        %2194 = vmatpush1.msra.mxu0 0.0
        %2195 = vmatprep.subr.mxu0 0.0
        %2196 = vmatpush1.msra.mxu0 0.0
        %2197 = vmatprep.subr.mxu0 0.0
        %2198 = vmatpush1.msra.mxu0 0.0
        %2199 = vmatprep.subr.mxu0 0.0
        %2200 = vmatpush1.msra.mxu0 0.0
        %2201 = vmatprep.subr.mxu0 0.0
        %2202 = vmatpush1.msra.mxu0 0.0
        %2203 = vmatprep.subr.mxu0 0.0
        %2204 = vmatpush1.msra.mxu0 0.0
        %2205 = vmatprep.subr.mxu0 0.0
        %2206 = vmatpush1.msra.mxu0 0.0
        %2207 = vmatprep.mubr.f32.mxu0 0.0
        %2208 = vmatmul.mubr.f32.gmra.mrb[0].mxu0 %v237
        %v2209 = vpop.f32.mrb[0].mxu0
        %v2210 = vadd.f32 0.0, %v2209
        %v2211 = vpop.f32.mrb[0].mxu0
        %v2212 = vadd.f32 0.0, %v2211
        %2213 = vmatprep.mubr.f32.mxu0 0.0
        %2214 = vmatmul.mubr.f32.gmra.mrb[0].mxu0 %v240
        %v2215 = vpop.f32.mrb[0].mxu0
        %v2216 = vadd.f32 0.0, %v2215
        %v2217 = vpop.f32.mrb[0].mxu0
        %v2218 = vadd.f32 0.0, %v2217
        %2219 = vmatprep.mubr.f32.mxu0 0.0
        %2220 = vmatmul.mubr.f32.gmra.mrb[0].mxu0 %v243
        %v2221 = vpop.f32.mrb[0].mxu0
        %v2222 = vadd.f32 0.0, %v2221
        %v2223 = vpop.f32.mrb[0].mxu0
        %v2224 = vadd.f32 0.0, %v2223
        %2225 = vmatprep.mubr.f32.mxu0 0.0
        %2226 = vmatmul.mubr.f32.gmra.mrb[0].mxu0 %v246
        %v2227 = vpop.f32.mrb[0].mxu0
        %v2228 = vadd.f32 0.0, %v2227
        %v2229 = vpop.f32.mrb[0].mxu0
        %v2230 = vadd.f32 0.0, %v2229
        %2231 = vdwg.mxu0
        %2232 = vmatprep.subr.mxu0 0.0
        %2233 = vmatpush1.msra.mxu0 %v2141
        %2234 = vmatprep.subr.mxu0 0.0
        %2235 = vmatpush1.msra.mxu0 0.0
        %2236 = vmatprep.subr.mxu0 0.0
        %2237 = vmatpush1.msra.mxu0 0.0
        %2238 = vmatprep.subr.mxu0 0.0
        %2239 = vmatpush1.msra.mxu0 0.0
        %2240 = vmatprep.subr.mxu0 0.0
        %2241 = vmatpush1.msra.mxu0 0.0
        %2242 = vmatprep.subr.mxu0 0.0
        %2243 = vmatpush1.msra.mxu0 0.0
        %2244 = vmatprep.subr.mxu0 0.0
        %2245 = vmatpush1.msra.mxu0 0.0
        %2246 = vmatprep.subr.mxu0 0.0
        %2247 = vmatpush1.msra.mxu0 0.0
        %2248 = vmatprep.subr.mxu0 0.0
        %2249 = vmatpush1.msra.mxu0 0.0
        %2250 = vmatprep.subr.mxu0 0.0
        %2251 = vmatpush1.msra.mxu0 0.0
        %2252 = vmatprep.subr.mxu0 0.0
        %2253 = vmatpush1.msra.mxu0 0.0
        %2254 = vmatprep.subr.mxu0 0.0
        %2255 = vmatpush1.msra.mxu0 0.0
        %2256 = vmatprep.subr.mxu0 0.0
        %2257 = vmatpush1.msra.mxu0 0.0
        %2258 = vmatprep.subr.mxu0 0.0
        %2259 = vmatpush1.msra.mxu0 0.0
        %2260 = vmatprep.subr.mxu0 0.0
        %2261 = vmatpush1.msra.mxu0 0.0
        %2262 = vmatprep.subr.mxu0 0.0
        %2263 = vmatpush1.msra.mxu0 0.0
        %2264 = vmatprep.subr.mxu0 0.0
        %2265 = vmatpush1.msra.mxu0 0.0
        %2266 = vmatprep.subr.mxu0 0.0
        %2267 = vmatpush1.msra.mxu0 0.0
        %2268 = vmatprep.subr.mxu0 0.0
        %2269 = vmatpush1.msra.mxu0 0.0
        %2270 = vmatprep.subr.mxu0 0.0
        %2271 = vmatpush1.msra.mxu0 0.0
        %2272 = vmatprep.subr.mxu0 0.0
        %2273 = vmatpush1.msra.mxu0 0.0
        %2274 = vmatprep.subr.mxu0 0.0
        %2275 = vmatpush1.msra.mxu0 0.0
        %2276 = vmatprep.subr.mxu0 0.0
        %2277 = vmatpush1.msra.mxu0 0.0
        %2278 = vmatprep.subr.mxu0 0.0
        %2279 = vmatpush1.msra.mxu0 0.0
        %2280 = vmatprep.subr.mxu0 0.0
        %2281 = vmatpush1.msra.mxu0 0.0
        %2282 = vmatprep.subr.mxu0 0.0
        %2283 = vmatpush1.msra.mxu0 0.0
        %2284 = vmatprep.subr.mxu0 0.0
        %2285 = vmatpush1.msra.mxu0 0.0
        %2286 = vmatprep.subr.mxu0 0.0
        %2287 = vmatpush1.msra.mxu0 0.0
        %2288 = vmatprep.subr.mxu0 0.0
        %2289 = vmatpush1.msra.mxu0 0.0
        %2290 = vmatprep.subr.mxu0 0.0
        %2291 = vmatpush1.msra.mxu0 0.0
        %2292 = vmatprep.subr.mxu0 0.0
        %2293 = vmatpush1.msra.mxu0 0.0
        %2294 = vmatprep.subr.mxu0 0.0
        %2295 = vmatpush1.msra.mxu0 0.0
        %2296 = vmatprep.mubr.f32.mxu0 0.0
        %2297 = vmatmul.mubr.f32.gmra.mrb[0].mxu0 %v237
        %v2298 = vpop.f32.mrb[0].mxu0
        %v2299 = vadd.f32 0.0, %v2298
        %v2300 = vpop.f32.mrb[0].mxu0
        %2301 = vmatprep.mubr.f32.mxu0 0.0
        %2302 = vmatmul.mubr.f32.gmra.mrb[0].mxu0 %v240
        %v2303 = vpop.f32.mrb[0].mxu0
        %v2304 = vadd.f32 0.0, %v2303
        %v2305 = vpop.f32.mrb[0].mxu0
        %2306 = vmatprep.mubr.f32.mxu0 0.0
        %2307 = vmatmul.mubr.f32.gmra.mrb[0].mxu0 %v243
        %v2308 = vpop.f32.mrb[0].mxu0
        %v2309 = vadd.f32 0.0, %v2308
        %v2310 = vpop.f32.mrb[0].mxu0
        %2311 = vmatprep.mubr.f32.mxu0 0.0
        %2312 = vmatmul.mubr.f32.gmra.mrb[0].mxu0 %v246
        %v2313 = vpop.f32.mrb[0].mxu0
        %v2314 = vadd.f32 0.0, %v2313
        %v2315 = vpop.f32.mrb[0].mxu0
        %2316 = vdwg.mxu0
        %2317 = vrot.lane.b32.xlu0 %v2120, 92
        %v2318 = vpop.permute.xlu0 %2317
        %2319 = vrot.lane.b32.xlu0 %v2124, 92
        %v2320 = vpop.permute.xlu0 %2319
        %2321 = vrot.lane.b32.xlu0 %v2121, 92
        %v2322 = vpop.permute.xlu0 %2321
        %2323 = vrot.lane.b32.xlu0 %v2125, 92
        %v2324 = vpop.permute.xlu0 %2323
        %vm2325 = vcmask 752640
        %v2326 = vsel %vm2325, %v2318, %v2320
        %v2327 = vsel %vm2325, %v2320, %v2322
        %v2328 = vsel %vm2325, %v2322, %v2324
        %v2329 = vsel %vm248, %v2326, 0
        %v2331 = vsel %vm248, %v2327, 0
        %v2333 = vsel %vm248, %v2328, 0
        %2335 = vmatprep.subr.mxu0 %v2331
        %2336 = vmatpush1.msra.mxu0 %v2329
        %2337 = vmatprep.subr.mxu0 0.0
        %2338 = vmatpush1.msra.mxu0 0.0
        %2339 = vmatprep.subr.mxu0 0.0
        %2340 = vmatpush1.msra.mxu0 0.0
        %2341 = vmatprep.subr.mxu0 0.0
        %2342 = vmatpush1.msra.mxu0 0.0
        %2343 = vmatprep.subr.mxu0 0.0
        %2344 = vmatpush1.msra.mxu0 0.0
        %2345 = vmatprep.subr.mxu0 0.0
        %2346 = vmatpush1.msra.mxu0 0.0
        %2347 = vmatprep.subr.mxu0 0.0
        %2348 = vmatpush1.msra.mxu0 0.0
        %2349 = vmatprep.subr.mxu0 0.0
        %2350 = vmatpush1.msra.mxu0 0.0
        %2351 = vmatprep.subr.mxu0 0.0
        %2352 = vmatpush1.msra.mxu0 0.0
        %2353 = vmatprep.subr.mxu0 0.0
        %2354 = vmatpush1.msra.mxu0 0.0
        %2355 = vmatprep.subr.mxu0 0.0
        %2356 = vmatpush1.msra.mxu0 0.0
        %2357 = vmatprep.subr.mxu0 0.0
        %2358 = vmatpush1.msra.mxu0 0.0
        %2359 = vmatprep.subr.mxu0 0.0
        %2360 = vmatpush1.msra.mxu0 0.0
        %2361 = vmatprep.subr.mxu0 0.0
        %2362 = vmatpush1.msra.mxu0 0.0
        %2363 = vmatprep.subr.mxu0 0.0
        %2364 = vmatpush1.msra.mxu0 0.0
        %2365 = vmatprep.subr.mxu0 0.0
        %2366 = vmatpush1.msra.mxu0 0.0
        %2367 = vmatprep.subr.mxu0 0.0
        %2368 = vmatpush1.msra.mxu0 0.0
        %2369 = vmatprep.subr.mxu0 0.0
        %2370 = vmatpush1.msra.mxu0 0.0
        %2371 = vmatprep.subr.mxu0 0.0
        %2372 = vmatpush1.msra.mxu0 0.0
        %2373 = vmatprep.subr.mxu0 0.0
        %2374 = vmatpush1.msra.mxu0 0.0
        %2375 = vmatprep.subr.mxu0 0.0
        %2376 = vmatpush1.msra.mxu0 0.0
        %2377 = vmatprep.subr.mxu0 0.0
        %2378 = vmatpush1.msra.mxu0 0.0
        %2379 = vmatprep.subr.mxu0 0.0
        %2380 = vmatpush1.msra.mxu0 0.0
        %2381 = vmatprep.subr.mxu0 0.0
        %2382 = vmatpush1.msra.mxu0 0.0
        %2383 = vmatprep.subr.mxu0 0.0
        %2384 = vmatpush1.msra.mxu0 0.0
        %2385 = vmatprep.subr.mxu0 0.0
        %2386 = vmatpush1.msra.mxu0 0.0
        %2387 = vmatprep.subr.mxu0 0.0
        %2388 = vmatpush1.msra.mxu0 0.0
        %2389 = vmatprep.subr.mxu0 0.0
        %2390 = vmatpush1.msra.mxu0 0.0
        %2391 = vmatprep.subr.mxu0 0.0
        %2392 = vmatpush1.msra.mxu0 0.0
        %2393 = vmatprep.subr.mxu0 0.0
        %2394 = vmatpush1.msra.mxu0 0.0
        %2395 = vmatprep.subr.mxu0 0.0
        %2396 = vmatpush1.msra.mxu0 0.0
        %2397 = vmatprep.subr.mxu0 0.0
        %2398 = vmatpush1.msra.mxu0 0.0
        %2399 = vmatprep.mubr.f32.mxu0 0.0
        %2400 = vmatmul.mubr.f32.gmra.mrb[0].mxu0 %v442
        %v2401 = vpop.f32.mrb[0].mxu0
        %v2402 = vadd.f32 %v2210, %v2401
        %v2403 = vpop.f32.mrb[0].mxu0
        %v2404 = vadd.f32 %v2212, %v2403
        %2405 = vmatprep.mubr.f32.mxu0 0.0
        %2406 = vmatmul.mubr.f32.gmra.mrb[0].mxu0 %v445
        %v2407 = vpop.f32.mrb[0].mxu0
        %v2408 = vadd.f32 %v2216, %v2407
        %v2409 = vpop.f32.mrb[0].mxu0
        %v2410 = vadd.f32 %v2218, %v2409
        %2411 = vmatprep.mubr.f32.mxu0 0.0
        %2412 = vmatmul.mubr.f32.gmra.mrb[0].mxu0 %v448
        %v2413 = vpop.f32.mrb[0].mxu0
        %v2414 = vadd.f32 %v2222, %v2413
        %v2415 = vpop.f32.mrb[0].mxu0
        %v2416 = vadd.f32 %v2224, %v2415
        %2417 = vmatprep.mubr.f32.mxu0 0.0
        %2418 = vmatmul.mubr.f32.gmra.mrb[0].mxu0 %v451
        %v2419 = vpop.f32.mrb[0].mxu0
        %v2420 = vadd.f32 %v2228, %v2419
        %v2421 = vpop.f32.mrb[0].mxu0
        %v2422 = vadd.f32 %v2230, %v2421
        %2423 = vdwg.mxu0
        %2424 = vmatprep.subr.mxu0 0.0
        %2425 = vmatpush1.msra.mxu0 %v2333
        %2426 = vmatprep.subr.mxu0 0.0
        %2427 = vmatpush1.msra.mxu0 0.0
        %2428 = vmatprep.subr.mxu0 0.0
        %2429 = vmatpush1.msra.mxu0 0.0
        %2430 = vmatprep.subr.mxu0 0.0
        %2431 = vmatpush1.msra.mxu0 0.0
        %2432 = vmatprep.subr.mxu0 0.0
        %2433 = vmatpush1.msra.mxu0 0.0
        %2434 = vmatprep.subr.mxu0 0.0
        %2435 = vmatpush1.msra.mxu0 0.0
        %2436 = vmatprep.subr.mxu0 0.0
        %2437 = vmatpush1.msra.mxu0 0.0
        %2438 = vmatprep.subr.mxu0 0.0
        %2439 = vmatpush1.msra.mxu0 0.0
        %2440 = vmatprep.subr.mxu0 0.0
        %2441 = vmatpush1.msra.mxu0 0.0
        %2442 = vmatprep.subr.mxu0 0.0
        %2443 = vmatpush1.msra.mxu0 0.0
        %2444 = vmatprep.subr.mxu0 0.0
        %2445 = vmatpush1.msra.mxu0 0.0
        %2446 = vmatprep.subr.mxu0 0.0
        %2447 = vmatpush1.msra.mxu0 0.0
        %2448 = vmatprep.subr.mxu0 0.0
        %2449 = vmatpush1.msra.mxu0 0.0
        %2450 = vmatprep.subr.mxu0 0.0
        %2451 = vmatpush1.msra.mxu0 0.0
        %2452 = vmatprep.subr.mxu0 0.0
        %2453 = vmatpush1.msra.mxu0 0.0
        %2454 = vmatprep.subr.mxu0 0.0
        %2455 = vmatpush1.msra.mxu0 0.0
        %2456 = vmatprep.subr.mxu0 0.0
        %2457 = vmatpush1.msra.mxu0 0.0
        %2458 = vmatprep.subr.mxu0 0.0
        %2459 = vmatpush1.msra.mxu0 0.0
        %2460 = vmatprep.subr.mxu0 0.0
        %2461 = vmatpush1.msra.mxu0 0.0
        %2462 = vmatprep.subr.mxu0 0.0
        %2463 = vmatpush1.msra.mxu0 0.0
        %2464 = vmatprep.subr.mxu0 0.0
        %2465 = vmatpush1.msra.mxu0 0.0
        %2466 = vmatprep.subr.mxu0 0.0
        %2467 = vmatpush1.msra.mxu0 0.0
        %2468 = vmatprep.subr.mxu0 0.0
        %2469 = vmatpush1.msra.mxu0 0.0
        %2470 = vmatprep.subr.mxu0 0.0
        %2471 = vmatpush1.msra.mxu0 0.0
        %2472 = vmatprep.subr.mxu0 0.0
        %2473 = vmatpush1.msra.mxu0 0.0
        %2474 = vmatprep.subr.mxu0 0.0
        %2475 = vmatpush1.msra.mxu0 0.0
        %2476 = vmatprep.subr.mxu0 0.0
        %2477 = vmatpush1.msra.mxu0 0.0
        %2478 = vmatprep.subr.mxu0 0.0
        %2479 = vmatpush1.msra.mxu0 0.0
        %2480 = vmatprep.subr.mxu0 0.0
        %2481 = vmatpush1.msra.mxu0 0.0
        %2482 = vmatprep.subr.mxu0 0.0
        %2483 = vmatpush1.msra.mxu0 0.0
        %2484 = vmatprep.subr.mxu0 0.0
        %2485 = vmatpush1.msra.mxu0 0.0
        %2486 = vmatprep.subr.mxu0 0.0
        %2487 = vmatpush1.msra.mxu0 0.0
        %2488 = vmatprep.mubr.f32.mxu0 0.0
        %2489 = vmatmul.mubr.f32.gmra.mrb[0].mxu0 %v442
        %v2490 = vpop.f32.mrb[0].mxu0
        %v2491 = vadd.f32 %v2299, %v2490
        %v2492 = vpop.f32.mrb[0].mxu0
        %2493 = vmatprep.mubr.f32.mxu0 0.0
        %2494 = vmatmul.mubr.f32.gmra.mrb[0].mxu0 %v445
        %v2495 = vpop.f32.mrb[0].mxu0
        %v2496 = vadd.f32 %v2304, %v2495
        %v2497 = vpop.f32.mrb[0].mxu0
        %2498 = vmatprep.mubr.f32.mxu0 0.0
        %2499 = vmatmul.mubr.f32.gmra.mrb[0].mxu0 %v448
        %v2500 = vpop.f32.mrb[0].mxu0
        %v2501 = vadd.f32 %v2309, %v2500
        %v2502 = vpop.f32.mrb[0].mxu0
        %2503 = vmatprep.mubr.f32.mxu0 0.0
        %2504 = vmatmul.mubr.f32.gmra.mrb[0].mxu0 %v451
        %v2505 = vpop.f32.mrb[0].mxu0
        %v2506 = vadd.f32 %v2314, %v2505
        %v2507 = vpop.f32.mrb[0].mxu0
        %2508 = vdwg.mxu0
        %2509 = vrot.lane.b32.xlu0 %v2120, 126
        %v2510 = vpop.permute.xlu0 %2509
        %2511 = vrot.lane.b32.xlu0 %v2124, 126
        %v2512 = vpop.permute.xlu0 %2511
        %2513 = vrot.lane.b32.xlu0 %v2121, 126
        %v2514 = vpop.permute.xlu0 %2513
        %2515 = vrot.lane.b32.xlu0 %v2125, 126
        %v2516 = vpop.permute.xlu0 %2515
        %vm2517 = vcmask 1031168
        %v2518 = vsel %vm2517, %v2510, %v2512
        %v2519 = vsel %vm2517, %v2512, %v2514
        %v2520 = vsel %vm2517, %v2514, %v2516
        %v2521 = vsel %vm248, %v2518, 0
        %v2523 = vsel %vm248, %v2519, 0
        %v2525 = vsel %vm248, %v2520, 0
        %2527 = vmatprep.subr.mxu0 %v2523
        %2528 = vmatpush1.msra.mxu0 %v2521
        %2529 = vmatprep.subr.mxu0 0.0
        %2530 = vmatpush1.msra.mxu0 0.0
        %2531 = vmatprep.subr.mxu0 0.0
        %2532 = vmatpush1.msra.mxu0 0.0
        %2533 = vmatprep.subr.mxu0 0.0
        %2534 = vmatpush1.msra.mxu0 0.0
        %2535 = vmatprep.subr.mxu0 0.0
        %2536 = vmatpush1.msra.mxu0 0.0
        %2537 = vmatprep.subr.mxu0 0.0
        %2538 = vmatpush1.msra.mxu0 0.0
        %2539 = vmatprep.subr.mxu0 0.0
        %2540 = vmatpush1.msra.mxu0 0.0
        %2541 = vmatprep.subr.mxu0 0.0
        %2542 = vmatpush1.msra.mxu0 0.0
        %2543 = vmatprep.subr.mxu0 0.0
        %2544 = vmatpush1.msra.mxu0 0.0
        %2545 = vmatprep.subr.mxu0 0.0
        %2546 = vmatpush1.msra.mxu0 0.0
        %2547 = vmatprep.subr.mxu0 0.0
        %2548 = vmatpush1.msra.mxu0 0.0
        %2549 = vmatprep.subr.mxu0 0.0
        %2550 = vmatpush1.msra.mxu0 0.0
        %2551 = vmatprep.subr.mxu0 0.0
        %2552 = vmatpush1.msra.mxu0 0.0
        %2553 = vmatprep.subr.mxu0 0.0
        %2554 = vmatpush1.msra.mxu0 0.0
        %2555 = vmatprep.subr.mxu0 0.0
        %2556 = vmatpush1.msra.mxu0 0.0
        %2557 = vmatprep.subr.mxu0 0.0
        %2558 = vmatpush1.msra.mxu0 0.0
        %2559 = vmatprep.subr.mxu0 0.0
        %2560 = vmatpush1.msra.mxu0 0.0
        %2561 = vmatprep.subr.mxu0 0.0
        %2562 = vmatpush1.msra.mxu0 0.0
        %2563 = vmatprep.subr.mxu0 0.0
        %2564 = vmatpush1.msra.mxu0 0.0
        %2565 = vmatprep.subr.mxu0 0.0
        %2566 = vmatpush1.msra.mxu0 0.0
        %2567 = vmatprep.subr.mxu0 0.0
        %2568 = vmatpush1.msra.mxu0 0.0
        %2569 = vmatprep.subr.mxu0 0.0
        %2570 = vmatpush1.msra.mxu0 0.0
        %2571 = vmatprep.subr.mxu0 0.0
        %2572 = vmatpush1.msra.mxu0 0.0
        %2573 = vmatprep.subr.mxu0 0.0
        %2574 = vmatpush1.msra.mxu0 0.0
        %2575 = vmatprep.subr.mxu0 0.0
        %2576 = vmatpush1.msra.mxu0 0.0
        %2577 = vmatprep.subr.mxu0 0.0
        %2578 = vmatpush1.msra.mxu0 0.0
        %2579 = vmatprep.subr.mxu0 0.0
        %2580 = vmatpush1.msra.mxu0 0.0
        %2581 = vmatprep.subr.mxu0 0.0
        %2582 = vmatpush1.msra.mxu0 0.0
        %2583 = vmatprep.subr.mxu0 0.0
        %2584 = vmatpush1.msra.mxu0 0.0
        %2585 = vmatprep.subr.mxu0 0.0
        %2586 = vmatpush1.msra.mxu0 0.0
        %2587 = vmatprep.subr.mxu0 0.0
        %2588 = vmatpush1.msra.mxu0 0.0
        %2589 = vmatprep.subr.mxu0 0.0
        %2590 = vmatpush1.msra.mxu0 0.0
        %2591 = vmatprep.mubr.f32.mxu0 0.0
        %2592 = vmatmul.mubr.f32.gmra.mrb[0].mxu0 %v646
        %v2593 = vpop.f32.mrb[0].mxu0
        %v2594 = vadd.f32 0.0, %v2593
        %v2595 = vpop.f32.mrb[0].mxu0
        %v2596 = vadd.f32 0.0, %v2595
        %2597 = vmatprep.mubr.f32.mxu0 0.0
        %2598 = vmatmul.mubr.f32.gmra.mrb[0].mxu0 %v649
        %v2599 = vpop.f32.mrb[0].mxu0
        %v2600 = vadd.f32 0.0, %v2599
        %v2601 = vpop.f32.mrb[0].mxu0
        %v2602 = vadd.f32 0.0, %v2601
        %2603 = vmatprep.mubr.f32.mxu0 0.0
        %2604 = vmatmul.mubr.f32.gmra.mrb[0].mxu0 %v652
        %v2605 = vpop.f32.mrb[0].mxu0
        %v2606 = vadd.f32 0.0, %v2605
        %v2607 = vpop.f32.mrb[0].mxu0
        %v2608 = vadd.f32 0.0, %v2607
        %2609 = vmatprep.mubr.f32.mxu0 0.0
        %2610 = vmatmul.mubr.f32.gmra.mrb[0].mxu0 %v655
        %v2611 = vpop.f32.mrb[0].mxu0
        %v2612 = vadd.f32 0.0, %v2611
        %v2613 = vpop.f32.mrb[0].mxu0
        %v2614 = vadd.f32 0.0, %v2613
        %2615 = vdwg.mxu0
        %2616 = vmatprep.subr.mxu0 0.0
        %2617 = vmatpush1.msra.mxu0 %v2525
        %2618 = vmatprep.subr.mxu0 0.0
        %2619 = vmatpush1.msra.mxu0 0.0
        %2620 = vmatprep.subr.mxu0 0.0
        %2621 = vmatpush1.msra.mxu0 0.0
        %2622 = vmatprep.subr.mxu0 0.0
        %2623 = vmatpush1.msra.mxu0 0.0
        %2624 = vmatprep.subr.mxu0 0.0
        %2625 = vmatpush1.msra.mxu0 0.0
        %2626 = vmatprep.subr.mxu0 0.0
        %2627 = vmatpush1.msra.mxu0 0.0
        %2628 = vmatprep.subr.mxu0 0.0
        %2629 = vmatpush1.msra.mxu0 0.0
        %2630 = vmatprep.subr.mxu0 0.0
        %2631 = vmatpush1.msra.mxu0 0.0
        %2632 = vmatprep.subr.mxu0 0.0
        %2633 = vmatpush1.msra.mxu0 0.0
        %2634 = vmatprep.subr.mxu0 0.0
        %2635 = vmatpush1.msra.mxu0 0.0
        %2636 = vmatprep.subr.mxu0 0.0
        %2637 = vmatpush1.msra.mxu0 0.0
        %2638 = vmatprep.subr.mxu0 0.0
        %2639 = vmatpush1.msra.mxu0 0.0
        %2640 = vmatprep.subr.mxu0 0.0
        %2641 = vmatpush1.msra.mxu0 0.0
        %2642 = vmatprep.subr.mxu0 0.0
        %2643 = vmatpush1.msra.mxu0 0.0
        %2644 = vmatprep.subr.mxu0 0.0
        %2645 = vmatpush1.msra.mxu0 0.0
        %2646 = vmatprep.subr.mxu0 0.0
        %2647 = vmatpush1.msra.mxu0 0.0
        %2648 = vmatprep.subr.mxu0 0.0
        %2649 = vmatpush1.msra.mxu0 0.0
        %2650 = vmatprep.subr.mxu0 0.0
        %2651 = vmatpush1.msra.mxu0 0.0
        %2652 = vmatprep.subr.mxu0 0.0
        %2653 = vmatpush1.msra.mxu0 0.0
        %2654 = vmatprep.subr.mxu0 0.0
        %2655 = vmatpush1.msra.mxu0 0.0
        %2656 = vmatprep.subr.mxu0 0.0
        %2657 = vmatpush1.msra.mxu0 0.0
        %2658 = vmatprep.subr.mxu0 0.0
        %2659 = vmatpush1.msra.mxu0 0.0
        %2660 = vmatprep.subr.mxu0 0.0
        %2661 = vmatpush1.msra.mxu0 0.0
        %2662 = vmatprep.subr.mxu0 0.0
        %2663 = vmatpush1.msra.mxu0 0.0
        %2664 = vmatprep.subr.mxu0 0.0
        %2665 = vmatpush1.msra.mxu0 0.0
        %2666 = vmatprep.subr.mxu0 0.0
        %2667 = vmatpush1.msra.mxu0 0.0
        %2668 = vmatprep.subr.mxu0 0.0
        %2669 = vmatpush1.msra.mxu0 0.0
        %2670 = vmatprep.subr.mxu0 0.0
        %2671 = vmatpush1.msra.mxu0 0.0
        %2672 = vmatprep.subr.mxu0 0.0
        %2673 = vmatpush1.msra.mxu0 0.0
        %2674 = vmatprep.subr.mxu0 0.0
        %2675 = vmatpush1.msra.mxu0 0.0
        %2676 = vmatprep.subr.mxu0 0.0
        %2677 = vmatpush1.msra.mxu0 0.0
        %2678 = vmatprep.subr.mxu0 0.0
        %2679 = vmatpush1.msra.mxu0 0.0
        %2680 = vmatprep.mubr.f32.mxu0 0.0
        %2681 = vmatmul.mubr.f32.gmra.mrb[0].mxu0 %v646
        %v2682 = vpop.f32.mrb[0].mxu0
        %v2683 = vadd.f32 0.0, %v2682
        %v2684 = vpop.f32.mrb[0].mxu0
        %2685 = vmatprep.mubr.f32.mxu0 0.0
        %2686 = vmatmul.mubr.f32.gmra.mrb[0].mxu0 %v649
        %v2687 = vpop.f32.mrb[0].mxu0
        %v2688 = vadd.f32 0.0, %v2687
        %v2689 = vpop.f32.mrb[0].mxu0
        %2690 = vmatprep.mubr.f32.mxu0 0.0
        %2691 = vmatmul.mubr.f32.gmra.mrb[0].mxu0 %v652
        %v2692 = vpop.f32.mrb[0].mxu0
        %v2693 = vadd.f32 0.0, %v2692
        %v2694 = vpop.f32.mrb[0].mxu0
        %2695 = vmatprep.mubr.f32.mxu0 0.0
        %2696 = vmatmul.mubr.f32.gmra.mrb[0].mxu0 %v655
        %v2697 = vpop.f32.mrb[0].mxu0
        %v2698 = vadd.f32 0.0, %v2697
        %v2699 = vpop.f32.mrb[0].mxu0
        %2700 = vdwg.mxu0
        %v2701 = vadd.f32 %v2402, %v2594
        %v2702 = vadd.f32 %v2404, %v2596
        %v2703 = vadd.f32 %v2491, %v2683
        %v2704 = vadd.f32 %v2408, %v2600
        %v2705 = vadd.f32 %v2410, %v2602
        %v2706 = vadd.f32 %v2496, %v2688
        %v2707 = vadd.f32 %v2414, %v2606
        %v2708 = vadd.f32 %v2416, %v2608
        %v2709 = vadd.f32 %v2501, %v2693
        %v2710 = vadd.f32 %v2420, %v2612
        %v2711 = vadd.f32 %v2422, %v2614
        %v2712 = vadd.f32 %v2506, %v2698
        %v2713 = vadd.f32 %v2701, %v852
        %v2714 = vadd.f32 %v2702, %v852
        %v2715 = vadd.f32 %v2703, %v852
        %v2716 = vadd.f32 %v2704, %v857
        %v2717 = vadd.f32 %v2705, %v857
        %v2718 = vadd.f32 %v2706, %v857
        %v2719 = vadd.f32 %v2707, %v862
        %v2720 = vadd.f32 %v2708, %v862
        %v2721 = vadd.f32 %v2709, %v862
        %v2722 = vadd.f32 %v2710, %v867
        %v2723 = vadd.f32 %v2711, %v867
        %v2724 = vadd.f32 %v2712, %v867
        %s2725 = scalar_lea.vmem %s198, 288 [#allocation3]
        %2726 = vst [vmem:[%s2725] sm:$0xff] %v2713
        %2727 = vst [vmem:[%s2725 + $0x8] sm:$0xff] %v2714
        %2728 = vst [vmem:[%s2725 + $0x10] sm:$0xff] %v2715
        %2729 = vst [vmem:[%s2725 + $0x18] sm:$0xff] %v2716
        %2730 = vst [vmem:[%s2725 + $0x20] sm:$0xff] %v2717
        %2731 = vst [vmem:[%s2725 + $0x28] sm:$0xff] %v2718
        %2732 = vst [vmem:[%s2725 + $0x30] sm:$0xff] %v2719
        %2733 = vst [vmem:[%s2725 + $0x38] sm:$0xff] %v2720
        %2734 = vst [vmem:[%s2725 + $0x40] sm:$0xff] %v2721
        %2735 = vst [vmem:[%s2725 + $0x48] sm:$0xff] %v2722
        %2736 = vst [vmem:[%s2725 + $0x50] sm:$0xff] %v2723
        %2737 = vst [vmem:[%s2725 + $0x58] sm:$0xff] %v2724
        %s2738 = sand.u32 %s90, 1
        %s2739 = sand.u32 %s90, 1
        %s2740 = smul.addr %s2739, 384
        %s2741 = scalar_lea.vmem [#allocation3], %s2740
        // Predicated region
        $region56: #{directional_conv_layer.1} parent=50 // pred_check
          %p2742 = pneg %p100
        $region57: #{directional_conv_layer.1} parent=50 // pred_check_branch
          %2744 = sbr.rel (%p2742) target = $region59
        $region58: #{directional_conv_layer.1} parent=50 // pred_region
          %s2745 = smul.addr %s14, 12
          %s2746 = smul.addr %s2745, 8
          %s2747 = scalar_lea.vmem %s3, %s2746
          // Predicated region
          $region60: #{directional_conv_layer.1} parent=58 // pred_check
            _
          $region61: #{directional_conv_layer.1} parent=58 // pred_check_branch
            %2749 = sbr.rel (0) target = $region63
          $region62: #{directional_conv_layer.1} parent=58 // pred_region
            // Predicated region
            $region64: #{directional_conv_layer.1} parent=62 // pred_check
              _
            $region65: #{directional_conv_layer.1} parent=62 // pred_check_branch
              %2751 = sbr.rel (0) target = $region67
            $region66: #{directional_conv_layer.1} parent=62 // pred_region
              loop: start=0, step=1, limit=1
              $region68: #{directional_conv_layer.1} parent=66 // loop_pre_header
                _
              $region69: #{directional_conv_layer.1} parent=66 // loop_header
                %s2753 = sphi 0, %s2757
                %p2754 = scmp.ge.s32.totalorder %s2753, 1
                %s2758 = sphi %s2741, %s2741
                %s2759 = sphi %s2747, %s2747
              $region70: #{directional_conv_layer.1} parent=66 // loop_header_branch
                %2756 = sbr.rel (%p2754) target = $region74
              $region71: #{directional_conv_layer.1} parent=66 // loop_body
                %v2760 = vld [vmem:[%s2758] sm:$0xff]
                %2761 = vst [vmem:[%s2759] sm:$0xff] %v2760
                %v2762 = vld [vmem:[%s2758 + $0x8] sm:$0xff]
                %2763 = vst [vmem:[%s2759 + $0x8] sm:$0xff] %v2762
                %v2764 = vld [vmem:[%s2758 + $0x10] sm:$0xff]
                %2765 = vst [vmem:[%s2759 + $0x10] sm:$0xff] %v2764
                %v2766 = vld [vmem:[%s2758 + $0x18] sm:$0xff]
                %2767 = vst [vmem:[%s2759 + $0x18] sm:$0xff] %v2766
                %v2768 = vld [vmem:[%s2758 + $0x20] sm:$0xff]
                %2769 = vst [vmem:[%s2759 + $0x20] sm:$0xff] %v2768
                %v2770 = vld [vmem:[%s2758 + $0x28] sm:$0xff]
                %2771 = vst [vmem:[%s2759 + $0x28] sm:$0xff] %v2770
                %v2772 = vld [vmem:[%s2758 + $0x30] sm:$0xff]
                %2773 = vst [vmem:[%s2759 + $0x30] sm:$0xff] %v2772
                %v2774 = vld [vmem:[%s2758 + $0x38] sm:$0xff]
                %2775 = vst [vmem:[%s2759 + $0x38] sm:$0xff] %v2774
                %v2776 = vld [vmem:[%s2758 + $0x40] sm:$0xff]
                %2777 = vst [vmem:[%s2759 + $0x40] sm:$0xff] %v2776
                %v2778 = vld [vmem:[%s2758 + $0x48] sm:$0xff]
                %2779 = vst [vmem:[%s2759 + $0x48] sm:$0xff] %v2778
                %v2780 = vld [vmem:[%s2758 + $0x50] sm:$0xff]
                %2781 = vst [vmem:[%s2759 + $0x50] sm:$0xff] %v2780
                %v2782 = vld [vmem:[%s2758 + $0x58] sm:$0xff]
                %2783 = vst [vmem:[%s2759 + $0x58] sm:$0xff] %v2782
                %v2784 = vld [vmem:[%s2758 + $0x60] sm:$0xff]
                %2785 = vst [vmem:[%s2759 + $0xc0] sm:$0xff] %v2784
                %v2786 = vld [vmem:[%s2758 + $0x68] sm:$0xff]
                %2787 = vst [vmem:[%s2759 + $0xc8] sm:$0xff] %v2786
                %v2788 = vld [vmem:[%s2758 + $0x70] sm:$0xff]
                %2789 = vst [vmem:[%s2759 + $0xd0] sm:$0xff] %v2788
                %v2790 = vld [vmem:[%s2758 + $0x78] sm:$0xff]
                %2791 = vst [vmem:[%s2759 + $0xd8] sm:$0xff] %v2790
                %v2792 = vld [vmem:[%s2758 + $0x80] sm:$0xff]
                %2793 = vst [vmem:[%s2759 + $0xe0] sm:$0xff] %v2792
                %v2794 = vld [vmem:[%s2758 + $0x88] sm:$0xff]
                %2795 = vst [vmem:[%s2759 + $0xe8] sm:$0xff] %v2794
                %v2796 = vld [vmem:[%s2758 + $0x90] sm:$0xff]
                %2797 = vst [vmem:[%s2759 + $0xf0] sm:$0xff] %v2796
                %v2798 = vld [vmem:[%s2758 + $0x98] sm:$0xff]
                %2799 = vst [vmem:[%s2759 + $0xf8] sm:$0xff] %v2798
                %v2800 = vld [vmem:[%s2758 + $0xa0] sm:$0xff]
                %2801 = vst [vmem:[%s2759 + $0x100] sm:$0xff] %v2800
                %v2802 = vld [vmem:[%s2758 + $0xa8] sm:$0xff]
                %2803 = vst [vmem:[%s2759 + $0x108] sm:$0xff] %v2802
                %v2804 = vld [vmem:[%s2758 + $0xb0] sm:$0xff]
                %2805 = vst [vmem:[%s2759 + $0x110] sm:$0xff] %v2804
                %v2806 = vld [vmem:[%s2758 + $0xb8] sm:$0xff]
                %2807 = vst [vmem:[%s2759 + $0x118] sm:$0xff] %v2806
                %v2808 = vld [vmem:[%s2758 + $0xc0] sm:$0xff]
                %2809 = vst [vmem:[%s2759 + $0x180] sm:$0xff] %v2808
                %v2810 = vld [vmem:[%s2758 + $0xc8] sm:$0xff]
                %2811 = vst [vmem:[%s2759 + $0x188] sm:$0xff] %v2810
                %v2812 = vld [vmem:[%s2758 + $0xd0] sm:$0xff]
                %2813 = vst [vmem:[%s2759 + $0x190] sm:$0xff] %v2812
                %v2814 = vld [vmem:[%s2758 + $0xd8] sm:$0xff]
                %2815 = vst [vmem:[%s2759 + $0x198] sm:$0xff] %v2814
                %v2816 = vld [vmem:[%s2758 + $0xe0] sm:$0xff]
                %2817 = vst [vmem:[%s2759 + $0x1a0] sm:$0xff] %v2816
                %v2818 = vld [vmem:[%s2758 + $0xe8] sm:$0xff]
                %2819 = vst [vmem:[%s2759 + $0x1a8] sm:$0xff] %v2818
                %v2820 = vld [vmem:[%s2758 + $0xf0] sm:$0xff]
                %2821 = vst [vmem:[%s2759 + $0x1b0] sm:$0xff] %v2820
                %v2822 = vld [vmem:[%s2758 + $0xf8] sm:$0xff]
                %2823 = vst [vmem:[%s2759 + $0x1b8] sm:$0xff] %v2822
                %v2824 = vld [vmem:[%s2758 + $0x100] sm:$0xff]
                %2825 = vst [vmem:[%s2759 + $0x1c0] sm:$0xff] %v2824
                %v2826 = vld [vmem:[%s2758 + $0x108] sm:$0xff]
                %2827 = vst [vmem:[%s2759 + $0x1c8] sm:$0xff] %v2826
                %v2828 = vld [vmem:[%s2758 + $0x110] sm:$0xff]
                %2829 = vst [vmem:[%s2759 + $0x1d0] sm:$0xff] %v2828
                %v2830 = vld [vmem:[%s2758 + $0x118] sm:$0xff]
                %2831 = vst [vmem:[%s2759 + $0x1d8] sm:$0xff] %v2830
                %v2832 = vld [vmem:[%s2758 + $0x120] sm:$0xff]
                %2833 = vst [vmem:[%s2759 + $0x240] sm:$0xff] %v2832
                %v2834 = vld [vmem:[%s2758 + $0x128] sm:$0xff]
                %2835 = vst [vmem:[%s2759 + $0x248] sm:$0xff] %v2834
                %v2836 = vld [vmem:[%s2758 + $0x130] sm:$0xff]
                %2837 = vst [vmem:[%s2759 + $0x250] sm:$0xff] %v2836
                %v2838 = vld [vmem:[%s2758 + $0x138] sm:$0xff]
                %2839 = vst [vmem:[%s2759 + $0x258] sm:$0xff] %v2838
                %v2840 = vld [vmem:[%s2758 + $0x140] sm:$0xff]
                %2841 = vst [vmem:[%s2759 + $0x260] sm:$0xff] %v2840
                %v2842 = vld [vmem:[%s2758 + $0x148] sm:$0xff]
                %2843 = vst [vmem:[%s2759 + $0x268] sm:$0xff] %v2842
                %v2844 = vld [vmem:[%s2758 + $0x150] sm:$0xff]
                %2845 = vst [vmem:[%s2759 + $0x270] sm:$0xff] %v2844
                %v2846 = vld [vmem:[%s2758 + $0x158] sm:$0xff]
                %2847 = vst [vmem:[%s2759 + $0x278] sm:$0xff] %v2846
                %v2848 = vld [vmem:[%s2758 + $0x160] sm:$0xff]
                %2849 = vst [vmem:[%s2759 + $0x280] sm:$0xff] %v2848
                %v2850 = vld [vmem:[%s2758 + $0x168] sm:$0xff]
                %2851 = vst [vmem:[%s2759 + $0x288] sm:$0xff] %v2850
                %v2852 = vld [vmem:[%s2758 + $0x170] sm:$0xff]
                %2853 = vst [vmem:[%s2759 + $0x290] sm:$0xff] %v2852
                %v2854 = vld [vmem:[%s2758 + $0x178] sm:$0xff]
                %2855 = vst [vmem:[%s2759 + $0x298] sm:$0xff] %v2854
              $region72: #{directional_conv_layer.1} parent=66 // loop_footer
                %s2757 = sadd.s32 1, %s2753
              $region73: #{directional_conv_layer.1} parent=66 // loop_footer_branch
                %2752 = sbr.rel target = $region69
              $region74: #{directional_conv_layer.1} parent=66 // loop_exit
                _
            $region67: #{directional_conv_layer.1} parent=62 // pred_fallthru
              _
            // Predicated region
            $region75: #{directional_conv_layer.1} parent=62 // pred_check
              _
            $region76: #{directional_conv_layer.1} parent=62 // pred_check_branch
              %2857 = sbr.rel target = $region78
            $region77: #{directional_conv_layer.1} parent=62 // pred_region
              _
            $region78: #{directional_conv_layer.1} parent=62 // pred_fallthru
              _
          $region63: #{directional_conv_layer.1} parent=58 // pred_fallthru
            _
          %2858 = vnop
        $region59: #{directional_conv_layer.1} parent=50 // pred_fallthru
          _
      $region51: #{directional_conv_layer.1} parent=5 // pred_fallthru
        _
      %p2859 = scmp.le.s32.totalorder 2, %s9
      // Predicated region
      $region79: #{directional_conv_layer.1} parent=5 // pred_check
        %p2860 = pneg %p2859
      $region80: #{directional_conv_layer.1} parent=5 // pred_check_branch
        %2862 = sbr.rel (%p2860) target = $region82
      $region81: #{directional_conv_layer.1} parent=5 // pred_region
        %s2863 = ssub.s32 %s9, 2
        // Predicated region
        $region83: #{directional_conv_layer.1} parent=81 // pred_check
          %p2864 = pneg %p106
        $region84: #{directional_conv_layer.1} parent=81 // pred_check_branch
          %2866 = sbr.rel (%p2864) target = $region86
        $region85: #{directional_conv_layer.1} parent=81 // pred_region
          %s2867 = sand.u32 %s91, 1
          %s2868 = sand.u32 %s91, 1
          %s2869 = smul.addr %s2868, 384
          %s2870 = scalar_lea.vmem [#allocation3], %s2869
        $region86: #{directional_conv_layer.1} parent=81 // pred_fallthru
          _
      $region82: #{directional_conv_layer.1} parent=5 // pred_fallthru
        _
    $region6: #{directional_conv_layer.1} parent=1 // loop_footer
      %s13 = sadd.s32 1, %s9
    $region7: #{directional_conv_layer.1} parent=1 // loop_footer_branch
      %8 = sbr.rel target = $region3
    $region8: #{directional_conv_layer.1} parent=1 // loop_exit
      _

</llo_original>
